<compile_context>
chip_gen: v5e
topology: v5e:2x2
jax: 0.10.0
libtpu: 0.0.40
codegen_flags: <defaults>
</compile_context>

<pallas_src>
import functools

import jax
import jax.numpy as jnp
import numpy as np
from jax.experimental import pallas as pl
from jax.experimental.pallas import tpu as pltpu


def _adv_cls_loss_kernel(rois_t_ref, gt_ref, labels_ref, feat_ref, w_ref, b_ref,
                         out_ref, *, threshold):
    rois_t = rois_t_ref[...]          # [4, TN]  f32  (x1,y1,x2,y2 rows, rois on lanes)
    gt = gt_ref[...]                  # [G, 4]   f32
    labels = labels_ref[...]          # [G, 1]   i32
    feat = feat_ref[...]              # [TN, K]  f32
    w = w_ref[...]                    # [C, K]   f32  (PyTorch Linear weight layout)
    b = b_ref[...]                    # [C, 1]   f32

    G = gt.shape[0]
    C = w.shape[0]
    TN = rois_t.shape[1]

    # ---- classifier: logits^T [C, TN] = W @ feat^T + b  (MXU, trans-B contraction) ----
    logits_t = jax.lax.dot_general(
        w, feat, (((1,), (1,)), ((), ())),
        preferred_element_type=jnp.float32) + b                       # [C, TN]

    # ---- pairwise jaccard(rois, gt_box) laid out [G, TN] (N on lanes) ----
    x1 = rois_t[0:1, :]; y1 = rois_t[1:2, :]                          # [1, TN]
    x2 = rois_t[2:3, :]; y2 = rois_t[3:4, :]
    gx1 = gt[:, 0:1]; gy1 = gt[:, 1:2]; gx2 = gt[:, 2:3]; gy2 = gt[:, 3:4]   # [G, 1]

    iw = jnp.maximum(jnp.minimum(x2, gx2) - jnp.maximum(x1, gx1), 0.0)       # [G, TN]
    ih = jnp.maximum(jnp.minimum(y2, gy2) - jnp.maximum(y1, gy1), 0.0)
    inter = iw * ih
    area_a = (x2 - x1) * (y2 - y1)                                           # [1, TN]
    area_b = (gx2 - gx1) * (gy2 - gy1)                                       # [G, 1]
    iou = inter / (area_a + area_b - inter)                                  # [G, TN]

    # ---- max / first-max argmax over the gt axis (sublanes, size G) ----
    max_iou = jnp.max(iou, axis=0, keepdims=True)                            # [1, TN]
    grow = jax.lax.broadcasted_iota(jnp.int32, (G, TN), 0)                   # [G, TN]
    g_idx = jnp.min(jnp.where(iou == max_iou, grow, G), axis=0, keepdims=True)  # [1, TN] i32
    onehot_gt = grow == g_idx                                                # [G, TN] bool

    mask = (max_iou > threshold).astype(jnp.float32)                         # [1, TN]

    # matched gt label per roi via one-hot select (no dynamic gather)
    matched_label = jnp.sum(jnp.where(onehot_gt, labels, 0),
                            axis=0, keepdims=True)                           # [1, TN] i32

    # ---- per-roi cross entropy over classes (sublane axis, size C) ----
    m = jnp.max(logits_t, axis=0, keepdims=True)                             # [1, TN]
    lse = m + jnp.log(jnp.sum(jnp.exp(logits_t - m), axis=0, keepdims=True)) # [1, TN]
    crow = jax.lax.broadcasted_iota(jnp.int32, (C, TN), 0)                   # [C, TN]
    picked = jnp.sum(jnp.where(crow == matched_label, logits_t, 0.0),
                     axis=0, keepdims=True)                                  # [1, TN]
    ce = lse - picked                                                        # [1, TN]

    zero = jnp.zeros_like(ce)
    out_ref[...] = jnp.concatenate(
        [ce, mask, max_iou,
         g_idx.astype(jnp.float32), matched_label.astype(jnp.float32),
         zero, zero, zero], axis=0)                                          # [8, TN]


def _adv_cls_loss_pallas(rois, gt_box, gt_labels, shared_feat, weight, bias,
                         overlap_threshold, block_n=128):
    """Returns a lane-dense [8, N] slab: rows = (ce, mask, max_iou, gt_idx, label, pad...)."""
    N = rois.shape[0]
    G = gt_box.shape[0]
    C, K = weight.shape

    n_pad = (-N) % block_n
    Np = N + n_pad

    rois_t = jnp.transpose(rois).astype(jnp.float32)          # [4, N]  tiny, fuses under jit
    feat = shared_feat.astype(jnp.float32)
    if n_pad:
        rois_t = jnp.pad(rois_t, ((0, 0), (0, n_pad)))        # zero boxes -> iou 0 -> masked out
        feat = jnp.pad(feat, ((0, n_pad), (0, 0)))
    labels_col = gt_labels.astype(jnp.int32).reshape(G, 1)
    bias_col = bias.astype(jnp.float32).reshape(C, 1)

    kernel = functools.partial(_adv_cls_loss_kernel, threshold=float(overlap_threshold))
    slab = pl.pallas_call(
        kernel,
        out_shape=jax.ShapeDtypeStruct((8, Np), jnp.float32),
        grid=(Np // block_n,),
        in_specs=[
            pl.BlockSpec((4, block_n), lambda i: (0, i)),      # rois^T
            pl.BlockSpec((G, 4), lambda i: (0, 0)),            # gt boxes
            pl.BlockSpec((G, 1), lambda i: (0, 0)),            # gt labels
            pl.BlockSpec((block_n, K), lambda i: (i, 0)),      # shared_feat
            pl.BlockSpec((C, K), lambda i: (0, 0)),            # classifier weight
            pl.BlockSpec((C, 1), lambda i: (0, 0)),            # classifier bias
        ],
        out_specs=pl.BlockSpec((8, block_n), lambda i: (0, i)),
        compiler_params=pltpu.CompilerParams(
            dimension_semantics=("parallel",)),
    )(rois_t, gt_box.astype(jnp.float32), labels_col, feat,
      weight.astype(jnp.float32), bias_col)
    return slab[:, :N]


@functools.partial(jax.jit, static_argnames=("overlap_threshold",))
def classification_adversarial_loss1_fwd(rois, gt_box, shared_feat, gt_labels,
                                         weight, bias, *, overlap_threshold):
    """Device-side forward. Returns (loss, num_selected, mask, gt_idx, max_iou, per_roi_ce)."""
    # GradientReversalLayer.forward is identity; detach/clone is a no-op functionally.
    slab = _adv_cls_loss_pallas(rois, gt_box, gt_labels, shared_feat, weight, bias,
                                overlap_threshold)
    ce, mask_f, max_iou, g_idx = slab[0], slab[1], slab[2], slab[3]
    count = jnp.sum(mask_f)
    loss = jnp.sum(ce * mask_f) / jnp.maximum(count, 1.0)      # mean CE over masked rois
    return loss, count, mask_f > 0.5, g_idx.astype(jnp.int32), max_iou, ce


def classification_adversarial_loss1_forward(rois, gt_box, shared_feat, gt_labels,
                                             weight, bias, overlap_threshold):
    """Mirrors ClassificationAdversarialLoss1.forward: scalar loss, or None if no roi selected."""
    loss, count, mask, g_idx, max_iou, ce = jax.device_get(
        classification_adversarial_loss1_fwd(
            rois, gt_box, shared_feat, gt_labels, weight, bias,
            overlap_threshold=overlap_threshold))               # single host round-trip
    if count == 0:
        return None
    return float(loss)


# ------------------------- pure-JAX reference (for checking) -------------------------
def _reference(rois, gt_box, shared_feat, gt_labels, weight, bias, thr):
    logits = shared_feat @ weight.T + bias[None, :]
    iw = jnp.maximum(jnp.minimum(rois[:, None, 2], gt_box[None, :, 2]) -
                     jnp.maximum(rois[:, None, 0], gt_box[None, :, 0]), 0.0)
    ih = jnp.maximum(jnp.minimum(rois[:, None, 3], gt_box[None, :, 3]) -
                     jnp.maximum(rois[:, None, 1], gt_box[None, :, 1]), 0.0)
    inter = iw * ih
    aa = (rois[:, 2] - rois[:, 0]) * (rois[:, 3] - rois[:, 1])
    ab = (gt_box[:, 2] - gt_box[:, 0]) * (gt_box[:, 3] - gt_box[:, 1])
    iou = inter / (aa[:, None] + ab[None, :] - inter)
    max_iou = jnp.max(iou, axis=1)
    idx = jnp.argmax(iou, axis=1)
    mask = max_iou > thr
    matched = gt_labels[idx]
    m = jnp.max(logits, axis=1, keepdims=True)
    lse = (m + jnp.log(jnp.sum(jnp.exp(logits - m), axis=1, keepdims=True)))[:, 0]
    picked = jnp.take_along_axis(logits, matched[:, None].astype(jnp.int32), axis=1)[:, 0]
    ce = lse - picked
    count = jnp.sum(mask)
    loss = jnp.sum(ce * mask) / jnp.maximum(count, 1)
    return loss, count, mask, idx, max_iou, ce


if __name__ == "__main__":
    key = jax.random.PRNGKey(0)
    N, G, C, K = 128, 8, 16, 4096      # K=4096 is fixed by the module's Linear(4096, C)
    thr = 0.5

    k1, k2, k3, k4, k5, k6 = jax.random.split(key, 6)
    xy = jax.random.uniform(k1, (N, 2), minval=0.0, maxval=80.0)
    wh = jax.random.uniform(k2, (N, 2), minval=16.0, maxval=64.0)
    rois = jnp.concatenate([xy, xy + wh], axis=1).astype(jnp.float32)          # [N, 4]

    # gt boxes = first G rois + small jitter -> guarantees some IoU > 0.5
    jitter = jax.random.uniform(k3, (G, 4), minval=-2.0, maxval=2.0)
    gt_box = (rois[:G] + jitter).astype(jnp.float32)                           # [G, 4]

    shared_feat = (0.1 * jax.random.normal(k4, (N, K))).astype(jnp.float32)    # [N, 4096]
    gt_labels = jax.random.randint(k5, (G,), 0, C)                             # [G]
    weight = (0.001 * jax.random.normal(k6, (C, K))).astype(jnp.float32)       # init_weights
    bias = jnp.zeros((C,), jnp.float32)

    # run the Pallas-backed forward
    out_k = classification_adversarial_loss1_fwd(
        rois, gt_box, shared_feat, gt_labels, weight, bias, overlap_threshold=thr)
    jax.block_until_ready(out_k)
    loss_k, count_k, mask_k, idx_k, max_iou_k, ce_k = out_k

    # check against a pure-JAX reference
    loss_r, count_r, mask_r, idx_r, max_iou_r, ce_r = _reference(
        rois, gt_box, shared_feat, gt_labels, weight, bias, thr)

    np.testing.assert_allclose(np.asarray(max_iou_k), np.asarray(max_iou_r),
                               rtol=1e-5, atol=1e-5)
    np.testing.assert_array_equal(np.asarray(mask_k), np.asarray(mask_r))
    np.testing.assert_array_equal(np.asarray(idx_k), np.asarray(idx_r))
    np.testing.assert_allclose(np.asarray(ce_k), np.asarray(ce_r), rtol=1e-4, atol=1e-4)
    np.testing.assert_allclose(float(loss_k), float(loss_r), rtol=1e-4, atol=1e-4)
    assert int(count_k) == int(count_r) and int(count_k) > 0

    # module-style forward (None if nothing selected, scalar loss otherwise)
    loss_mod = classification_adversarial_loss1_forward(
        rois, gt_box, shared_feat, gt_labels, weight, bias, thr)
    assert loss_mod is not None
    np.testing.assert_allclose(loss_mod, float(loss_r), rtol=1e-4, atol=1e-4)

    print("KERNEL_OK")
</pallas_src>

<mosaic_0001>
module attributes {stable_mosaic.version = 11 : i64} {
  func.func @_adv_cls_loss_kernel(%arg0: i32, %arg1: memref<4x128xf32, #tpu.memory_space<vmem>>, %arg2: memref<8x4xf32, #tpu.memory_space<vmem>>, %arg3: memref<8x1xi32, #tpu.memory_space<vmem>>, %arg4: memref<128x4096xf32, #tpu.memory_space<vmem>>, %arg5: memref<16x4096xf32, #tpu.memory_space<vmem>>, %arg6: memref<16x1xf32, #tpu.memory_space<vmem>>, %arg7: memref<8x128xf32, #tpu.memory_space<vmem>>) attributes {dimension_semantics = [#tpu.dimension_semantics<parallel>], iteration_bounds = array<i64: 1>, scalar_prefetch = 0 : i64, scratch_operands = 0 : i64, tpu.core_type = #tpu.core_type<tc>, window_params = [{transform_indices = @transform_0, window_bounds = array<i64: 4, 128>}, {pipeline_mode = #tpu.pipeline_mode<synchronous>, transform_indices = @transform_1, window_bounds = array<i64: 8, 4>}, {pipeline_mode = #tpu.pipeline_mode<synchronous>, transform_indices = @transform_2, window_bounds = array<i64: 8, 1>}, {transform_indices = @transform_3, window_bounds = array<i64: 128, 4096>}, {pipeline_mode = #tpu.pipeline_mode<synchronous>, transform_indices = @transform_4, window_bounds = array<i64: 16, 4096>}, {pipeline_mode = #tpu.pipeline_mode<synchronous>, transform_indices = @transform_5, window_bounds = array<i64: 16, 1>}, {transform_indices = @transform_6, window_bounds = array<i64: 8, 128>}]} {
    %c0 = arith.constant 0 : index
    %c0_0 = arith.constant 0 : index
    %0 = vector.load %arg1[%c0, %c0_0] : memref<4x128xf32, #tpu.memory_space<vmem>>, vector<4x128xf32>
    %c0_1 = arith.constant 0 : index
    %c0_2 = arith.constant 0 : index
    %1 = vector.load %arg2[%c0_1, %c0_2] : memref<8x4xf32, #tpu.memory_space<vmem>>, vector<8x4xf32>
    %c0_3 = arith.constant 0 : index
    %c0_4 = arith.constant 0 : index
    %2 = vector.load %arg3[%c0_3, %c0_4] : memref<8x1xi32, #tpu.memory_space<vmem>>, vector<8x1xi32>
    %c0_5 = arith.constant 0 : index
    %c0_6 = arith.constant 0 : index
    %3 = vector.load %arg4[%c0_5, %c0_6] : memref<128x4096xf32, #tpu.memory_space<vmem>>, vector<128x4096xf32>
    %c0_7 = arith.constant 0 : index
    %c0_8 = arith.constant 0 : index
    %4 = vector.load %arg5[%c0_7, %c0_8] : memref<16x4096xf32, #tpu.memory_space<vmem>>, vector<16x4096xf32>
    %c0_9 = arith.constant 0 : index
    %c0_10 = arith.constant 0 : index
    %5 = vector.load %arg6[%c0_9, %c0_10] : memref<16x1xf32, #tpu.memory_space<vmem>>, vector<16x1xf32>
    %cst = arith.constant dense<0.000000e+00> : vector<16x128xf32>
    %6 = tpu.matmul %4, %3, %cst {dimension_numbers = #tpu.dot_dimension_numbers<[1], [1], [0], [0], [0, 0, 1, 0], [], []>} : vector<16x4096xf32>, vector<128x4096xf32>, vector<16x128xf32> -> vector<16x128xf32>
    %7 = vector.broadcast %5 : vector<16x1xf32> to vector<16x128xf32>
    %8 = arith.addf %6, %7 : vector<16x128xf32>
    %9 = vector.extract_strided_slice %0 {offsets = [0, 0], sizes = [1, 128], strides = [1, 1]} : vector<4x128xf32> to vector<1x128xf32>
    %10 = vector.extract_strided_slice %0 {offsets = [1, 0], sizes = [1, 128], strides = [1, 1]} : vector<4x128xf32> to vector<1x128xf32>
    %11 = vector.extract_strided_slice %0 {offsets = [2, 0], sizes = [1, 128], strides = [1, 1]} : vector<4x128xf32> to vector<1x128xf32>
    %12 = vector.extract_strided_slice %0 {offsets = [3, 0], sizes = [1, 128], strides = [1, 1]} : vector<4x128xf32> to vector<1x128xf32>
    %13 = vector.extract_strided_slice %1 {offsets = [0, 0], sizes = [8, 1], strides = [1, 1]} : vector<8x4xf32> to vector<8x1xf32>
    %14 = vector.extract_strided_slice %1 {offsets = [0, 1], sizes = [8, 1], strides = [1, 1]} : vector<8x4xf32> to vector<8x1xf32>
    %15 = vector.extract_strided_slice %1 {offsets = [0, 2], sizes = [8, 1], strides = [1, 1]} : vector<8x4xf32> to vector<8x1xf32>
    %16 = vector.extract_strided_slice %1 {offsets = [0, 3], sizes = [8, 1], strides = [1, 1]} : vector<8x4xf32> to vector<8x1xf32>
    %17 = vector.broadcast %11 : vector<1x128xf32> to vector<8x128xf32>
    %18 = vector.broadcast %15 : vector<8x1xf32> to vector<8x128xf32>
    %19 = arith.minimumf %17, %18 : vector<8x128xf32>
    %20 = vector.broadcast %9 : vector<1x128xf32> to vector<8x128xf32>
    %21 = vector.broadcast %13 : vector<8x1xf32> to vector<8x128xf32>
    %22 = arith.maximumf %20, %21 : vector<8x128xf32>
    %23 = arith.subf %19, %22 : vector<8x128xf32>
    %cst_11 = arith.constant 0.000000e+00 : f32
    %24 = vector.broadcast %cst_11 : f32 to vector<8x128xf32>
    %25 = arith.maximumf %23, %24 : vector<8x128xf32>
    %26 = vector.broadcast %12 : vector<1x128xf32> to vector<8x128xf32>
    %27 = vector.broadcast %16 : vector<8x1xf32> to vector<8x128xf32>
    %28 = arith.minimumf %26, %27 : vector<8x128xf32>
    %29 = vector.broadcast %10 : vector<1x128xf32> to vector<8x128xf32>
    %30 = vector.broadcast %14 : vector<8x1xf32> to vector<8x128xf32>
    %31 = arith.maximumf %29, %30 : vector<8x128xf32>
    %32 = arith.subf %28, %31 : vector<8x128xf32>
    %cst_12 = arith.constant 0.000000e+00 : f32
    %33 = vector.broadcast %cst_12 : f32 to vector<8x128xf32>
    %34 = arith.maximumf %32, %33 : vector<8x128xf32>
    %35 = arith.mulf %25, %34 : vector<8x128xf32>
    %36 = arith.subf %11, %9 : vector<1x128xf32>
    %37 = arith.subf %12, %10 : vector<1x128xf32>
    %38 = arith.mulf %36, %37 : vector<1x128xf32>
    %39 = arith.subf %15, %13 : vector<8x1xf32>
    %40 = arith.subf %16, %14 : vector<8x1xf32>
    %41 = arith.mulf %39, %40 : vector<8x1xf32>
    %42 = vector.broadcast %38 : vector<1x128xf32> to vector<8x128xf32>
    %43 = vector.broadcast %41 : vector<8x1xf32> to vector<8x128xf32>
    %44 = arith.addf %42, %43 : vector<8x128xf32>
    %45 = arith.subf %44, %35 : vector<8x128xf32>
    %46 = arith.divf %35, %45 : vector<8x128xf32>
    %cst_13 = arith.constant dense<0xFF800000> : vector<128xf32>
    %47 = vector.multi_reduction <maximumf>, %46, %cst_13 [0] : vector<8x128xf32> to vector<128xf32>
    %48 = vector.shape_cast %47 : vector<128xf32> to vector<1x128xf32>
    %49 = tpu.iota {dimensions = array<i32: 0>} : vector<8x128xi32>
    %50 = vector.broadcast %48 : vector<1x128xf32> to vector<8x128xf32>
    %51 = arith.cmpf oeq, %46, %50 : vector<8x128xf32>
    %c8_i32 = arith.constant 8 : i32
    %52 = vector.broadcast %c8_i32 : i32 to vector<8x128xi32>
    %53 = arith.select %51, %49, %52 : vector<8x128xi1>, vector<8x128xi32>
    %cst_14 = arith.constant dense<2147483647> : vector<128xi32>
    %54 = vector.multi_reduction <minsi>, %53, %cst_14 [0] : vector<8x128xi32> to vector<128xi32>
    %55 = vector.shape_cast %54 : vector<128xi32> to vector<1x128xi32>
    %56 = vector.broadcast %55 : vector<1x128xi32> to vector<8x128xi32>
    %57 = arith.cmpi eq, %49, %56 : vector<8x128xi32>
    %cst_15 = arith.constant 5.000000e-01 : f32
    %58 = vector.broadcast %cst_15 : f32 to vector<1x128xf32>
    %59 = arith.cmpf ogt, %48, %58 : vector<1x128xf32>
    %60 = arith.extui %59 : vector<1x128xi1> to vector<1x128xi32>
    %61 = arith.sitofp %60 : vector<1x128xi32> to vector<1x128xf32>
    %c0_i32 = arith.constant 0 : i32
    %62 = vector.shape_cast %2 : vector<8x1xi32> to vector<8x1xi32>
    %63 = vector.broadcast %62 : vector<8x1xi32> to vector<8x128xi32>
    %64 = vector.broadcast %c0_i32 : i32 to vector<8x128xi32>
    %65 = arith.select %57, %63, %64 : vector<8x128xi1>, vector<8x128xi32>
    %cst_16 = arith.constant dense<0> : vector<128xi32>
    %66 = vector.multi_reduction <add>, %65, %cst_16 [0] : vector<8x128xi32> to vector<128xi32>
    %67 = vector.shape_cast %66 : vector<128xi32> to vector<1x128xi32>
    %cst_17 = arith.constant dense<0xFF800000> : vector<128xf32>
    %68 = vector.multi_reduction <maximumf>, %8, %cst_17 [0] : vector<16x128xf32> to vector<128xf32>
    %69 = vector.shape_cast %68 : vector<128xf32> to vector<1x128xf32>
    %70 = vector.broadcast %69 : vector<1x128xf32> to vector<16x128xf32>
    %71 = arith.subf %8, %70 : vector<16x128xf32>
    %72 = math.exp %71 : vector<16x128xf32>
    %cst_18 = arith.constant dense<0.000000e+00> : vector<128xf32>
    %73 = vector.multi_reduction <add>, %72, %cst_18 [0] : vector<16x128xf32> to vector<128xf32>
    %74 = vector.shape_cast %73 : vector<128xf32> to vector<1x128xf32>
    %75 = math.log %74 : vector<1x128xf32>
    %76 = arith.addf %69, %75 : vector<1x128xf32>
    %77 = tpu.iota {dimensions = array<i32: 0>} : vector<16x128xi32>
    %78 = vector.broadcast %67 : vector<1x128xi32> to vector<16x128xi32>
    %79 = arith.cmpi eq, %77, %78 : vector<16x128xi32>
    %cst_19 = arith.constant 0.000000e+00 : f32
    %80 = vector.broadcast %cst_19 : f32 to vector<16x128xf32>
    %81 = arith.select %79, %8, %80 : vector<16x128xi1>, vector<16x128xf32>
    %cst_20 = arith.constant dense<0.000000e+00> : vector<128xf32>
    %82 = vector.multi_reduction <add>, %81, %cst_20 [0] : vector<16x128xf32> to vector<128xf32>
    %83 = vector.shape_cast %82 : vector<128xf32> to vector<1x128xf32>
    %84 = arith.subf %76, %83 : vector<1x128xf32>
    %cst_21 = arith.constant 0.000000e+00 : f32
    %85 = vector.broadcast %cst_21 : f32 to vector<1x128xf32>
    %86 = arith.sitofp %55 : vector<1x128xi32> to vector<1x128xf32>
    %87 = arith.sitofp %67 : vector<1x128xi32> to vector<1x128xf32>
    %88 = tpu.concatenate %84, %61, %48, %86, %87, %85, %85, %85 in 0 : vector<1x128xf32>, vector<1x128xf32>, vector<1x128xf32>, vector<1x128xf32>, vector<1x128xf32>, vector<1x128xf32>, vector<1x128xf32>, vector<1x128xf32> -> vector<8x128xf32>
    %c0_22 = arith.constant 0 : index
    %c0_23 = arith.constant 0 : index
    %89 = vector.load %arg7[%c0_22, %c0_23] : memref<8x128xf32, #tpu.memory_space<vmem>>, vector<8x128xf32>
    tpu.vector_store %arg7[%c0_22, %c0_23], %88 {strides = array<i32>} : memref<8x128xf32, #tpu.memory_space<vmem>>, vector<8x128xf32>,
    return
  }
  func.func @transform_0(%arg0: i32) -> (i32, i32) {
    %c0_i32 = arith.constant 0 : i32
    %c0_i32_0 = arith.constant 0 : i32
    return %c0_i32, %arg0 : i32, i32
  }
  func.func @transform_1(%arg0: i32) -> (i32, i32) {
    %c0_i32 = arith.constant 0 : i32
    %c0_i32_0 = arith.constant 0 : i32
    %c0_i32_1 = arith.constant 0 : i32
    return %c0_i32, %c0_i32_0 : i32, i32
  }
  func.func @transform_2(%arg0: i32) -> (i32, i32) {
    %c0_i32 = arith.constant 0 : i32
    %c0_i32_0 = arith.constant 0 : i32
    %c0_i32_1 = arith.constant 0 : i32
    return %c0_i32, %c0_i32_0 : i32, i32
  }
  func.func @transform_3(%arg0: i32) -> (i32, i32) {
    %c0_i32 = arith.constant 0 : i32
    %c0_i32_0 = arith.constant 0 : i32
    return %arg0, %c0_i32 : i32, i32
  }
  func.func @transform_4(%arg0: i32) -> (i32, i32) {
    %c0_i32 = arith.constant 0 : i32
    %c0_i32_0 = arith.constant 0 : i32
    %c0_i32_1 = arith.constant 0 : i32
    return %c0_i32, %c0_i32_0 : i32, i32
  }
  func.func @transform_5(%arg0: i32) -> (i32, i32) {
    %c0_i32 = arith.constant 0 : i32
    %c0_i32_0 = arith.constant 0 : i32
    %c0_i32_1 = arith.constant 0 : i32
    return %c0_i32, %c0_i32_0 : i32, i32
  }
  func.func @transform_6(%arg0: i32) -> (i32, i32) {
    %c0_i32 = arith.constant 0 : i32
    %c0_i32_0 = arith.constant 0 : i32
    return %c0_i32, %arg0 : i32, i32
  }
}

</mosaic_0001>

<llo_original>
// kernel: classification_adversarial_loss1_fwd.1
$region0: #{classification_adversarial_loss1_fwd.1}
  #allocation0 [shape = 'u32[]', space=smem, size = 0x4, offset = 0x4, fixed_abs, tag = 'smem constant byte address 0x4 - core index']
  #allocation1 [shape = 'u32[72,128]{1,0:T(1,128)}', space=vmem, size = 0x9000, scoped, tag = 'internal scratch']
  %s0 = inlined_call_operand.hbm [shape: f32[4,128], index: 0, kind: input, shape index: {}]
  %s1 = inlined_call_operand.vmem [shape: f32[8,4], index: 1, kind: input, shape index: {}]
  %s2 = inlined_call_operand.vmem [shape: s32[8,1], index: 2, kind: input, shape index: {}]
  %s3 = inlined_call_operand.hbm [shape: f32[128,4096], index: 3, kind: input, shape index: {}]
  %s4 = inlined_call_operand.hbm [shape: f32[16,4096], index: 4, kind: input, shape index: {}]
  %s5 = inlined_call_operand.vmem [shape: f32[16,1], index: 5, kind: input, shape index: {}]
  %s6 = inlined_call_operand.vmem [shape: f32[8,128], index: 6, kind: output, shape index: {}]
  %s7 = sld [smem:[#allocation0]]
  $region46: #{classification_adversarial_loss1_fwd.1} parent=0
    _
  %s9 = ssub.s32 1, %s7
  %s10 = scalar_select 0, %s9, %s7
  $region1: #{classification_adversarial_loss1_fwd.1} parent=0
    #allocation2 [shape = 'u8[2048]{0}', space=vmem, size = 0x800, scoped, tag = 'input window, operand 0, single buffered']
    #allocation3 [shape = 's32[1]{0}', space=sflag, size = 0x4, scoped, tag = 'scoped memory for classification_adversarial_loss1_fwd.1']
    #allocation4 [shape = 'u8[2097152]{0}', space=vmem, size = 0x200000, scoped, tag = 'input window, operand 3, single buffered']
    #allocation5 [shape = 's32[1]{0}', space=sflag, size = 0x4, scoped, tag = 'scoped memory for classification_adversarial_loss1_fwd.1']
    #allocation6 [shape = 'u8[262144]{0}', space=vmem, size = 0x40000, scoped, tag = 'input window, operand 4, single buffered']
    %11 = vsyncpa [#allocation3], 0
    %12 = vsyncpa [#allocation5], 0
    // Predicated region
    $region2: #{classification_adversarial_loss1_fwd.1} parent=1 // pred_check
      _
    $region3: #{classification_adversarial_loss1_fwd.1} parent=1 // pred_check_branch
      %14 = sbr.rel (0) target = $region5
    $region4: #{classification_adversarial_loss1_fwd.1} parent=1 // pred_region
      %16 = vsyncadd [#allocation3], 0
      %s18 = sshll.u32 %s0, 4
      %s19 = int_to_ptr.hbm [resolvable:$true] %s18
      %s20 = sshll.u32 [#allocation2], 4
      %s21 = int_to_ptr.vmem [resolvable:$true] %s20
      %23 = dma.hbm_to_vmem [thread:$0]  %s19, 64, %s21, [#allocation3]
    $region5: #{classification_adversarial_loss1_fwd.1} parent=1 // pred_fallthru
      _
    // Predicated region
    $region6: #{classification_adversarial_loss1_fwd.1} parent=1 // pred_check
      _
    $region7: #{classification_adversarial_loss1_fwd.1} parent=1 // pred_check_branch
      %25 = sbr.rel (0) target = $region9
    $region8: #{classification_adversarial_loss1_fwd.1} parent=1 // pred_region
      _
    $region9: #{classification_adversarial_loss1_fwd.1} parent=1 // pred_fallthru
      _
    // Predicated region
    $region10: #{classification_adversarial_loss1_fwd.1} parent=1 // pred_check
      _
    $region11: #{classification_adversarial_loss1_fwd.1} parent=1 // pred_check_branch
      %27 = sbr.rel (0) target = $region13
    $region12: #{classification_adversarial_loss1_fwd.1} parent=1 // pred_region
      _
    $region13: #{classification_adversarial_loss1_fwd.1} parent=1 // pred_fallthru
      _
    // Predicated region
    $region14: #{classification_adversarial_loss1_fwd.1} parent=1 // pred_check
      _
    $region15: #{classification_adversarial_loss1_fwd.1} parent=1 // pred_check_branch
      %29 = sbr.rel (0) target = $region17
    $region16: #{classification_adversarial_loss1_fwd.1} parent=1 // pred_region
      %31 = vsyncadd [#allocation5], 0
      %s32 = sshll.u32 %s3, 4
      %s33 = int_to_ptr.hbm [resolvable:$true] %s32
      %s34 = sshll.u32 [#allocation4], 4
      %s35 = int_to_ptr.vmem [resolvable:$true] %s34
      %40 = dma.hbm_to_vmem [thread:$0]  %s33, 65536, %s35, [#allocation5], 4096, 4096, 256
    $region17: #{classification_adversarial_loss1_fwd.1} parent=1 // pred_fallthru
      _
    // Predicated region
    $region18: #{classification_adversarial_loss1_fwd.1} parent=1 // pred_check
      _
    $region19: #{classification_adversarial_loss1_fwd.1} parent=1 // pred_check_branch
      %42 = sbr.rel (0) target = $region21
    $region20: #{classification_adversarial_loss1_fwd.1} parent=1 // pred_region
      %44 = vsyncadd [#allocation5], 0
      %s45 = sshll.u32 %s4, 4
      %s46 = int_to_ptr.hbm [resolvable:$true] %s45
      %s47 = sshll.u32 [#allocation6], 4
      %s48 = int_to_ptr.vmem [resolvable:$true] %s47
      %53 = dma.hbm_to_vmem [thread:$0]  %s46, 8192, %s48, [#allocation5], 4096, 4096, 256
    $region21: #{classification_adversarial_loss1_fwd.1} parent=1 // pred_fallthru
      _
    // Predicated region
    $region22: #{classification_adversarial_loss1_fwd.1} parent=1 // pred_check
      _
    $region23: #{classification_adversarial_loss1_fwd.1} parent=1 // pred_check_branch
      %55 = sbr.rel (0) target = $region25
    $region24: #{classification_adversarial_loss1_fwd.1} parent=1 // pred_region
      _
    $region25: #{classification_adversarial_loss1_fwd.1} parent=1 // pred_fallthru
      _
    // Predicated region
    $region26: #{classification_adversarial_loss1_fwd.1} parent=1 // pred_check
      _
    $region27: #{classification_adversarial_loss1_fwd.1} parent=1 // pred_check_branch
      %57 = sbr.rel (0) target = $region29
    $region28: #{classification_adversarial_loss1_fwd.1} parent=1 // pred_region
      %59 = dma.done [#allocation3], 64
    $region29: #{classification_adversarial_loss1_fwd.1} parent=1 // pred_fallthru
      _
    // Predicated region
    $region30: #{classification_adversarial_loss1_fwd.1} parent=1 // pred_check
      _
    $region31: #{classification_adversarial_loss1_fwd.1} parent=1 // pred_check_branch
      %61 = sbr.rel (0) target = $region33
    $region32: #{classification_adversarial_loss1_fwd.1} parent=1 // pred_region
      %63 = dma.done [#allocation5], 65536
    $region33: #{classification_adversarial_loss1_fwd.1} parent=1 // pred_fallthru
      _
    // Predicated region
    $region34: #{classification_adversarial_loss1_fwd.1} parent=1 // pred_check
      _
    $region35: #{classification_adversarial_loss1_fwd.1} parent=1 // pred_check_branch
      %65 = sbr.rel (0) target = $region37
    $region36: #{classification_adversarial_loss1_fwd.1} parent=1 // pred_region
      %67 = dma.done [#allocation5], 8192
    $region37: #{classification_adversarial_loss1_fwd.1} parent=1 // pred_fallthru
      _
    %v68 = vld [vmem:[#allocation2] sm:$0xf]
    %v69 = vld [vmem:[%s1] sm:$0xff]
    %v70 = vld [vmem:[%s2] sm:$0xff]
    %v71 = vld [vmem:[#allocation4] sm:$0xff]
    %v72 = vld [vmem:[#allocation4 + $0x8] sm:$0xff]
    %v73 = vld [vmem:[#allocation4 + $0x10] sm:$0xff]
    %v74 = vld [vmem:[#allocation4 + $0x18] sm:$0xff]
    %v75 = vld [vmem:[#allocation4 + $0x20] sm:$0xff]
    %v76 = vld [vmem:[#allocation4 + $0x28] sm:$0xff]
    %v77 = vld [vmem:[#allocation4 + $0x30] sm:$0xff]
    %v78 = vld [vmem:[#allocation4 + $0x38] sm:$0xff]
    %v79 = vld [vmem:[#allocation4 + $0x40] sm:$0xff]
    %v80 = vld [vmem:[#allocation4 + $0x48] sm:$0xff]
    %v81 = vld [vmem:[#allocation4 + $0x50] sm:$0xff]
    %v82 = vld [vmem:[#allocation4 + $0x58] sm:$0xff]
    %v83 = vld [vmem:[#allocation4 + $0x60] sm:$0xff]
    %v84 = vld [vmem:[#allocation4 + $0x68] sm:$0xff]
    %v85 = vld [vmem:[#allocation4 + $0x70] sm:$0xff]
    %v86 = vld [vmem:[#allocation4 + $0x78] sm:$0xff]
    %v87 = vld [vmem:[#allocation4 + $0x80] sm:$0xff]
    %v88 = vld [vmem:[#allocation4 + $0x88] sm:$0xff]
    %v89 = vld [vmem:[#allocation4 + $0x90] sm:$0xff]
    %v90 = vld [vmem:[#allocation4 + $0x98] sm:$0xff]
    %v91 = vld [vmem:[#allocation4 + $0xa0] sm:$0xff]
    %v92 = vld [vmem:[#allocation4 + $0xa8] sm:$0xff]
    %v93 = vld [vmem:[#allocation4 + $0xb0] sm:$0xff]
    %v94 = vld [vmem:[#allocation4 + $0xb8] sm:$0xff]
    %v95 = vld [vmem:[#allocation4 + $0xc0] sm:$0xff]
    %v96 = vld [vmem:[#allocation4 + $0xc8] sm:$0xff]
    %v97 = vld [vmem:[#allocation4 + $0xd0] sm:$0xff]
    %v98 = vld [vmem:[#allocation4 + $0xd8] sm:$0xff]
    %v99 = vld [vmem:[#allocation4 + $0xe0] sm:$0xff]
    %v100 = vld [vmem:[#allocation4 + $0xe8] sm:$0xff]
    %v101 = vld [vmem:[#allocation4 + $0xf0] sm:$0xff]
    %v102 = vld [vmem:[#allocation4 + $0xf8] sm:$0xff]
    %v103 = vld [vmem:[#allocation4 + $0x100] sm:$0xff]
    %v104 = vld [vmem:[#allocation4 + $0x108] sm:$0xff]
    %v105 = vld [vmem:[#allocation4 + $0x110] sm:$0xff]
    %v106 = vld [vmem:[#allocation4 + $0x118] sm:$0xff]
    %v107 = vld [vmem:[#allocation4 + $0x120] sm:$0xff]
    %v108 = vld [vmem:[#allocation4 + $0x128] sm:$0xff]
    %v109 = vld [vmem:[#allocation4 + $0x130] sm:$0xff]
    %v110 = vld [vmem:[#allocation4 + $0x138] sm:$0xff]
    %v111 = vld [vmem:[#allocation4 + $0x140] sm:$0xff]
    %v112 = vld [vmem:[#allocation4 + $0x148] sm:$0xff]
    %v113 = vld [vmem:[#allocation4 + $0x150] sm:$0xff]
    %v114 = vld [vmem:[#allocation4 + $0x158] sm:$0xff]
    %v115 = vld [vmem:[#allocation4 + $0x160] sm:$0xff]
    %v116 = vld [vmem:[#allocation4 + $0x168] sm:$0xff]
    %v117 = vld [vmem:[#allocation4 + $0x170] sm:$0xff]
    %v118 = vld [vmem:[#allocation4 + $0x178] sm:$0xff]
    %v119 = vld [vmem:[#allocation4 + $0x180] sm:$0xff]
    %v120 = vld [vmem:[#allocation4 + $0x188] sm:$0xff]
    %v121 = vld [vmem:[#allocation4 + $0x190] sm:$0xff]
    %v122 = vld [vmem:[#allocation4 + $0x198] sm:$0xff]
    %v123 = vld [vmem:[#allocation4 + $0x1a0] sm:$0xff]
    %v124 = vld [vmem:[#allocation4 + $0x1a8] sm:$0xff]
    %v125 = vld [vmem:[#allocation4 + $0x1b0] sm:$0xff]
    %v126 = vld [vmem:[#allocation4 + $0x1b8] sm:$0xff]
    %v127 = vld [vmem:[#allocation4 + $0x1c0] sm:$0xff]
    %v128 = vld [vmem:[#allocation4 + $0x1c8] sm:$0xff]
    %v129 = vld [vmem:[#allocation4 + $0x1d0] sm:$0xff]
    %v130 = vld [vmem:[#allocation4 + $0x1d8] sm:$0xff]
    %v131 = vld [vmem:[#allocation4 + $0x1e0] sm:$0xff]
    %v132 = vld [vmem:[#allocation4 + $0x1e8] sm:$0xff]
    %v133 = vld [vmem:[#allocation4 + $0x1f0] sm:$0xff]
    %v134 = vld [vmem:[#allocation4 + $0x1f8] sm:$0xff]
    %v135 = vld [vmem:[#allocation4 + $0x200] sm:$0xff]
    %v136 = vld [vmem:[#allocation4 + $0x208] sm:$0xff]
    %v137 = vld [vmem:[#allocation4 + $0x210] sm:$0xff]
    %v138 = vld [vmem:[#allocation4 + $0x218] sm:$0xff]
    %v139 = vld [vmem:[#allocation4 + $0x220] sm:$0xff]
    %v140 = vld [vmem:[#allocation4 + $0x228] sm:$0xff]
    %v141 = vld [vmem:[#allocation4 + $0x230] sm:$0xff]
    %v142 = vld [vmem:[#allocation4 + $0x238] sm:$0xff]
    %v143 = vld [vmem:[#allocation4 + $0x240] sm:$0xff]
    %v144 = vld [vmem:[#allocation4 + $0x248] sm:$0xff]
    %v145 = vld [vmem:[#allocation4 + $0x250] sm:$0xff]
    %v146 = vld [vmem:[#allocation4 + $0x258] sm:$0xff]
    %v147 = vld [vmem:[#allocation4 + $0x260] sm:$0xff]
    %v148 = vld [vmem:[#allocation4 + $0x268] sm:$0xff]
    %v149 = vld [vmem:[#allocation4 + $0x270] sm:$0xff]
    %v150 = vld [vmem:[#allocation4 + $0x278] sm:$0xff]
    %v151 = vld [vmem:[#allocation4 + $0x280] sm:$0xff]
    %v152 = vld [vmem:[#allocation4 + $0x288] sm:$0xff]
    %v153 = vld [vmem:[#allocation4 + $0x290] sm:$0xff]
    %v154 = vld [vmem:[#allocation4 + $0x298] sm:$0xff]
    %v155 = vld [vmem:[#allocation4 + $0x2a0] sm:$0xff]
    %v156 = vld [vmem:[#allocation4 + $0x2a8] sm:$0xff]
    %v157 = vld [vmem:[#allocation4 + $0x2b0] sm:$0xff]
    %v158 = vld [vmem:[#allocation4 + $0x2b8] sm:$0xff]
    %v159 = vld [vmem:[#allocation4 + $0x2c0] sm:$0xff]
    %v160 = vld [vmem:[#allocation4 + $0x2c8] sm:$0xff]
    %v161 = vld [vmem:[#allocation4 + $0x2d0] sm:$0xff]
    %v162 = vld [vmem:[#allocation4 + $0x2d8] sm:$0xff]
    %v163 = vld [vmem:[#allocation4 + $0x2e0] sm:$0xff]
    %v164 = vld [vmem:[#allocation4 + $0x2e8] sm:$0xff]
    %v165 = vld [vmem:[#allocation4 + $0x2f0] sm:$0xff]
    %v166 = vld [vmem:[#allocation4 + $0x2f8] sm:$0xff]
    %v167 = vld [vmem:[#allocation4 + $0x300] sm:$0xff]
    %v168 = vld [vmem:[#allocation4 + $0x308] sm:$0xff]
    %v169 = vld [vmem:[#allocation4 + $0x310] sm:$0xff]
    %v170 = vld [vmem:[#allocation4 + $0x318] sm:$0xff]
    %v171 = vld [vmem:[#allocation4 + $0x320] sm:$0xff]
    %v172 = vld [vmem:[#allocation4 + $0x328] sm:$0xff]
    %v173 = vld [vmem:[#allocation4 + $0x330] sm:$0xff]
    %v174 = vld [vmem:[#allocation4 + $0x338] sm:$0xff]
    %v175 = vld [vmem:[#allocation4 + $0x340] sm:$0xff]
    %v176 = vld [vmem:[#allocation4 + $0x348] sm:$0xff]
    %v177 = vld [vmem:[#allocation4 + $0x350] sm:$0xff]
    %v178 = vld [vmem:[#allocation4 + $0x358] sm:$0xff]
    %v179 = vld [vmem:[#allocation4 + $0x360] sm:$0xff]
    %v180 = vld [vmem:[#allocation4 + $0x368] sm:$0xff]
    %v181 = vld [vmem:[#allocation4 + $0x370] sm:$0xff]
    %v182 = vld [vmem:[#allocation4 + $0x378] sm:$0xff]
    %v183 = vld [vmem:[#allocation4 + $0x380] sm:$0xff]
    %v184 = vld [vmem:[#allocation4 + $0x388] sm:$0xff]
    %v185 = vld [vmem:[#allocation4 + $0x390] sm:$0xff]
    %v186 = vld [vmem:[#allocation4 + $0x398] sm:$0xff]
    %v187 = vld [vmem:[#allocation4 + $0x3a0] sm:$0xff]
    %v188 = vld [vmem:[#allocation4 + $0x3a8] sm:$0xff]
    %v189 = vld [vmem:[#allocation4 + $0x3b0] sm:$0xff]
    %v190 = vld [vmem:[#allocation4 + $0x3b8] sm:$0xff]
    %v191 = vld [vmem:[#allocation4 + $0x3c0] sm:$0xff]
    %v192 = vld [vmem:[#allocation4 + $0x3c8] sm:$0xff]
    %v193 = vld [vmem:[#allocation4 + $0x3d0] sm:$0xff]
    %v194 = vld [vmem:[#allocation4 + $0x3d8] sm:$0xff]
    %v195 = vld [vmem:[#allocation4 + $0x3e0] sm:$0xff]
    %v196 = vld [vmem:[#allocation4 + $0x3e8] sm:$0xff]
    %v197 = vld [vmem:[#allocation4 + $0x3f0] sm:$0xff]
    %v198 = vld [vmem:[#allocation4 + $0x3f8] sm:$0xff]
    %v199 = vld [vmem:[#allocation4 + $0x400] sm:$0xff]
    %v200 = vld [vmem:[#allocation4 + $0x408] sm:$0xff]
    %v201 = vld [vmem:[#allocation4 + $0x410] sm:$0xff]
    %v202 = vld [vmem:[#allocation4 + $0x418] sm:$0xff]
    %v203 = vld [vmem:[#allocation4 + $0x420] sm:$0xff]
    %v204 = vld [vmem:[#allocation4 + $0x428] sm:$0xff]
    %v205 = vld [vmem:[#allocation4 + $0x430] sm:$0xff]
    %v206 = vld [vmem:[#allocation4 + $0x438] sm:$0xff]
    %v207 = vld [vmem:[#allocation4 + $0x440] sm:$0xff]
    %v208 = vld [vmem:[#allocation4 + $0x448] sm:$0xff]
    %v209 = vld [vmem:[#allocation4 + $0x450] sm:$0xff]
    %v210 = vld [vmem:[#allocation4 + $0x458] sm:$0xff]
    %v211 = vld [vmem:[#allocation4 + $0x460] sm:$0xff]
    %v212 = vld [vmem:[#allocation4 + $0x468] sm:$0xff]
    %v213 = vld [vmem:[#allocation4 + $0x470] sm:$0xff]
    %v214 = vld [vmem:[#allocation4 + $0x478] sm:$0xff]
    %v215 = vld [vmem:[#allocation4 + $0x480] sm:$0xff]
    %v216 = vld [vmem:[#allocation4 + $0x488] sm:$0xff]
    %v217 = vld [vmem:[#allocation4 + $0x490] sm:$0xff]
    %v218 = vld [vmem:[#allocation4 + $0x498] sm:$0xff]
    %v219 = vld [vmem:[#allocation4 + $0x4a0] sm:$0xff]
    %v220 = vld [vmem:[#allocation4 + $0x4a8] sm:$0xff]
    %v221 = vld [vmem:[#allocation4 + $0x4b0] sm:$0xff]
    %v222 = vld [vmem:[#allocation4 + $0x4b8] sm:$0xff]
    %v223 = vld [vmem:[#allocation4 + $0x4c0] sm:$0xff]
    %v224 = vld [vmem:[#allocation4 + $0x4c8] sm:$0xff]
    %v225 = vld [vmem:[#allocation4 + $0x4d0] sm:$0xff]
    %v226 = vld [vmem:[#allocation4 + $0x4d8] sm:$0xff]
    %v227 = vld [vmem:[#allocation4 + $0x4e0] sm:$0xff]
    %v228 = vld [vmem:[#allocation4 + $0x4e8] sm:$0xff]
    %v229 = vld [vmem:[#allocation4 + $0x4f0] sm:$0xff]
    %v230 = vld [vmem:[#allocation4 + $0x4f8] sm:$0xff]
    %v231 = vld [vmem:[#allocation4 + $0x500] sm:$0xff]
    %v232 = vld [vmem:[#allocation4 + $0x508] sm:$0xff]
    %v233 = vld [vmem:[#allocation4 + $0x510] sm:$0xff]
    %v234 = vld [vmem:[#allocation4 + $0x518] sm:$0xff]
    %v235 = vld [vmem:[#allocation4 + $0x520] sm:$0xff]
    %v236 = vld [vmem:[#allocation4 + $0x528] sm:$0xff]
    %v237 = vld [vmem:[#allocation4 + $0x530] sm:$0xff]
    %v238 = vld [vmem:[#allocation4 + $0x538] sm:$0xff]
    %v239 = vld [vmem:[#allocation4 + $0x540] sm:$0xff]
    %v240 = vld [vmem:[#allocation4 + $0x548] sm:$0xff]
    %v241 = vld [vmem:[#allocation4 + $0x550] sm:$0xff]
    %v242 = vld [vmem:[#allocation4 + $0x558] sm:$0xff]
    %v243 = vld [vmem:[#allocation4 + $0x560] sm:$0xff]
    %v244 = vld [vmem:[#allocation4 + $0x568] sm:$0xff]
    %v245 = vld [vmem:[#allocation4 + $0x570] sm:$0xff]
    %v246 = vld [vmem:[#allocation4 + $0x578] sm:$0xff]
    %v247 = vld [vmem:[#allocation4 + $0x580] sm:$0xff]
    %v248 = vld [vmem:[#allocation4 + $0x588] sm:$0xff]
    %v249 = vld [vmem:[#allocation4 + $0x590] sm:$0xff]
    %v250 = vld [vmem:[#allocation4 + $0x598] sm:$0xff]
    %v251 = vld [vmem:[#allocation4 + $0x5a0] sm:$0xff]
    %v252 = vld [vmem:[#allocation4 + $0x5a8] sm:$0xff]
    %v253 = vld [vmem:[#allocation4 + $0x5b0] sm:$0xff]
    %v254 = vld [vmem:[#allocation4 + $0x5b8] sm:$0xff]
    %v255 = vld [vmem:[#allocation4 + $0x5c0] sm:$0xff]
    %v256 = vld [vmem:[#allocation4 + $0x5c8] sm:$0xff]
    %v257 = vld [vmem:[#allocation4 + $0x5d0] sm:$0xff]
    %v258 = vld [vmem:[#allocation4 + $0x5d8] sm:$0xff]
    %v259 = vld [vmem:[#allocation4 + $0x5e0] sm:$0xff]
    %v260 = vld [vmem:[#allocation4 + $0x5e8] sm:$0xff]
    %v261 = vld [vmem:[#allocation4 + $0x5f0] sm:$0xff]
    %v262 = vld [vmem:[#allocation4 + $0x5f8] sm:$0xff]
    %v263 = vld [vmem:[#allocation4 + $0x600] sm:$0xff]
    %v264 = vld [vmem:[#allocation4 + $0x608] sm:$0xff]
    %v265 = vld [vmem:[#allocation4 + $0x610] sm:$0xff]
    %v266 = vld [vmem:[#allocation4 + $0x618] sm:$0xff]
    %v267 = vld [vmem:[#allocation4 + $0x620] sm:$0xff]
    %v268 = vld [vmem:[#allocation4 + $0x628] sm:$0xff]
    %v269 = vld [vmem:[#allocation4 + $0x630] sm:$0xff]
    %v270 = vld [vmem:[#allocation4 + $0x638] sm:$0xff]
    %v271 = vld [vmem:[#allocation4 + $0x640] sm:$0xff]
    %v272 = vld [vmem:[#allocation4 + $0x648] sm:$0xff]
    %v273 = vld [vmem:[#allocation4 + $0x650] sm:$0xff]
    %v274 = vld [vmem:[#allocation4 + $0x658] sm:$0xff]
    %v275 = vld [vmem:[#allocation4 + $0x660] sm:$0xff]
    %v276 = vld [vmem:[#allocation4 + $0x668] sm:$0xff]
    %v277 = vld [vmem:[#allocation4 + $0x670] sm:$0xff]
    %v278 = vld [vmem:[#allocation4 + $0x678] sm:$0xff]
    %v279 = vld [vmem:[#allocation4 + $0x680] sm:$0xff]
    %v280 = vld [vmem:[#allocation4 + $0x688] sm:$0xff]
    %v281 = vld [vmem:[#allocation4 + $0x690] sm:$0xff]
    %v282 = vld [vmem:[#allocation4 + $0x698] sm:$0xff]
    %v283 = vld [vmem:[#allocation4 + $0x6a0] sm:$0xff]
    %v284 = vld [vmem:[#allocation4 + $0x6a8] sm:$0xff]
    %v285 = vld [vmem:[#allocation4 + $0x6b0] sm:$0xff]
    %v286 = vld [vmem:[#allocation4 + $0x6b8] sm:$0xff]
    %v287 = vld [vmem:[#allocation4 + $0x6c0] sm:$0xff]
    %v288 = vld [vmem:[#allocation4 + $0x6c8] sm:$0xff]
    %v289 = vld [vmem:[#allocation4 + $0x6d0] sm:$0xff]
    %v290 = vld [vmem:[#allocation4 + $0x6d8] sm:$0xff]
    %v291 = vld [vmem:[#allocation4 + $0x6e0] sm:$0xff]
    %v292 = vld [vmem:[#allocation4 + $0x6e8] sm:$0xff]
    %v293 = vld [vmem:[#allocation4 + $0x6f0] sm:$0xff]
    %v294 = vld [vmem:[#allocation4 + $0x6f8] sm:$0xff]
    %v295 = vld [vmem:[#allocation4 + $0x700] sm:$0xff]
    %v296 = vld [vmem:[#allocation4 + $0x708] sm:$0xff]
    %v297 = vld [vmem:[#allocation4 + $0x710] sm:$0xff]
    %v298 = vld [vmem:[#allocation4 + $0x718] sm:$0xff]
    %v299 = vld [vmem:[#allocation4 + $0x720] sm:$0xff]
    %v300 = vld [vmem:[#allocation4 + $0x728] sm:$0xff]
    %v301 = vld [vmem:[#allocation4 + $0x730] sm:$0xff]
    %v302 = vld [vmem:[#allocation4 + $0x738] sm:$0xff]
    %v303 = vld [vmem:[#allocation4 + $0x740] sm:$0xff]
    %v304 = vld [vmem:[#allocation4 + $0x748] sm:$0xff]
    %v305 = vld [vmem:[#allocation4 + $0x750] sm:$0xff]
    %v306 = vld [vmem:[#allocation4 + $0x758] sm:$0xff]
    %v307 = vld [vmem:[#allocation4 + $0x760] sm:$0xff]
    %v308 = vld [vmem:[#allocation4 + $0x768] sm:$0xff]
    %v309 = vld [vmem:[#allocation4 + $0x770] sm:$0xff]
    %v310 = vld [vmem:[#allocation4 + $0x778] sm:$0xff]
    %v311 = vld [vmem:[#allocation4 + $0x780] sm:$0xff]
    %v312 = vld [vmem:[#allocation4 + $0x788] sm:$0xff]
    %v313 = vld [vmem:[#allocation4 + $0x790] sm:$0xff]
    %v314 = vld [vmem:[#allocation4 + $0x798] sm:$0xff]
    %v315 = vld [vmem:[#allocation4 + $0x7a0] sm:$0xff]
    %v316 = vld [vmem:[#allocation4 + $0x7a8] sm:$0xff]
    %v317 = vld [vmem:[#allocation4 + $0x7b0] sm:$0xff]
    %v318 = vld [vmem:[#allocation4 + $0x7b8] sm:$0xff]
    %v319 = vld [vmem:[#allocation4 + $0x7c0] sm:$0xff]
    %v320 = vld [vmem:[#allocation4 + $0x7c8] sm:$0xff]
    %v321 = vld [vmem:[#allocation4 + $0x7d0] sm:$0xff]
    %v322 = vld [vmem:[#allocation4 + $0x7d8] sm:$0xff]
    %v323 = vld [vmem:[#allocation4 + $0x7e0] sm:$0xff]
    %v324 = vld [vmem:[#allocation4 + $0x7e8] sm:$0xff]
    %v325 = vld [vmem:[#allocation4 + $0x7f0] sm:$0xff]
    %v326 = vld [vmem:[#allocation4 + $0x7f8] sm:$0xff]
    %v327 = vld [vmem:[#allocation4 + $0x800] sm:$0xff]
    %v328 = vld [vmem:[#allocation4 + $0x808] sm:$0xff]
    %v329 = vld [vmem:[#allocation4 + $0x810] sm:$0xff]
    %v330 = vld [vmem:[#allocation4 + $0x818] sm:$0xff]
    %v331 = vld [vmem:[#allocation4 + $0x820] sm:$0xff]
    %v332 = vld [vmem:[#allocation4 + $0x828] sm:$0xff]
    %v333 = vld [vmem:[#allocation4 + $0x830] sm:$0xff]
    %v334 = vld [vmem:[#allocation4 + $0x838] sm:$0xff]
    %v335 = vld [vmem:[#allocation4 + $0x840] sm:$0xff]
    %v336 = vld [vmem:[#allocation4 + $0x848] sm:$0xff]
    %v337 = vld [vmem:[#allocation4 + $0x850] sm:$0xff]
    %v338 = vld [vmem:[#allocation4 + $0x858] sm:$0xff]
    %v339 = vld [vmem:[#allocation4 + $0x860] sm:$0xff]
    %v340 = vld [vmem:[#allocation4 + $0x868] sm:$0xff]
    %v341 = vld [vmem:[#allocation4 + $0x870] sm:$0xff]
    %v342 = vld [vmem:[#allocation4 + $0x878] sm:$0xff]
    %v343 = vld [vmem:[#allocation4 + $0x880] sm:$0xff]
    %v344 = vld [vmem:[#allocation4 + $0x888] sm:$0xff]
    %v345 = vld [vmem:[#allocation4 + $0x890] sm:$0xff]
    %v346 = vld [vmem:[#allocation4 + $0x898] sm:$0xff]
    %v347 = vld [vmem:[#allocation4 + $0x8a0] sm:$0xff]
    %v348 = vld [vmem:[#allocation4 + $0x8a8] sm:$0xff]
    %v349 = vld [vmem:[#allocation4 + $0x8b0] sm:$0xff]
    %v350 = vld [vmem:[#allocation4 + $0x8b8] sm:$0xff]
    %v351 = vld [vmem:[#allocation4 + $0x8c0] sm:$0xff]
    %v352 = vld [vmem:[#allocation4 + $0x8c8] sm:$0xff]
    %v353 = vld [vmem:[#allocation4 + $0x8d0] sm:$0xff]
    %v354 = vld [vmem:[#allocation4 + $0x8d8] sm:$0xff]
    %v355 = vld [vmem:[#allocation4 + $0x8e0] sm:$0xff]
    %v356 = vld [vmem:[#allocation4 + $0x8e8] sm:$0xff]
    %v357 = vld [vmem:[#allocation4 + $0x8f0] sm:$0xff]
    %v358 = vld [vmem:[#allocation4 + $0x8f8] sm:$0xff]
    %v359 = vld [vmem:[#allocation4 + $0x900] sm:$0xff]
    %v360 = vld [vmem:[#allocation4 + $0x908] sm:$0xff]
    %v361 = vld [vmem:[#allocation4 + $0x910] sm:$0xff]
    %v362 = vld [vmem:[#allocation4 + $0x918] sm:$0xff]
    %v363 = vld [vmem:[#allocation4 + $0x920] sm:$0xff]
    %v364 = vld [vmem:[#allocation4 + $0x928] sm:$0xff]
    %v365 = vld [vmem:[#allocation4 + $0x930] sm:$0xff]
    %v366 = vld [vmem:[#allocation4 + $0x938] sm:$0xff]
    %v367 = vld [vmem:[#allocation4 + $0x940] sm:$0xff]
    %v368 = vld [vmem:[#allocation4 + $0x948] sm:$0xff]
    %v369 = vld [vmem:[#allocation4 + $0x950] sm:$0xff]
    %v370 = vld [vmem:[#allocation4 + $0x958] sm:$0xff]
    %v371 = vld [vmem:[#allocation4 + $0x960] sm:$0xff]
    %v372 = vld [vmem:[#allocation4 + $0x968] sm:$0xff]
    %v373 = vld [vmem:[#allocation4 + $0x970] sm:$0xff]
    %v374 = vld [vmem:[#allocation4 + $0x978] sm:$0xff]
    %v375 = vld [vmem:[#allocation4 + $0x980] sm:$0xff]
    %v376 = vld [vmem:[#allocation4 + $0x988] sm:$0xff]
    %v377 = vld [vmem:[#allocation4 + $0x990] sm:$0xff]
    %v378 = vld [vmem:[#allocation4 + $0x998] sm:$0xff]
    %v379 = vld [vmem:[#allocation4 + $0x9a0] sm:$0xff]
    %v380 = vld [vmem:[#allocation4 + $0x9a8] sm:$0xff]
    %v381 = vld [vmem:[#allocation4 + $0x9b0] sm:$0xff]
    %v382 = vld [vmem:[#allocation4 + $0x9b8] sm:$0xff]
    %v383 = vld [vmem:[#allocation4 + $0x9c0] sm:$0xff]
    %v384 = vld [vmem:[#allocation4 + $0x9c8] sm:$0xff]
    %v385 = vld [vmem:[#allocation4 + $0x9d0] sm:$0xff]
    %v386 = vld [vmem:[#allocation4 + $0x9d8] sm:$0xff]
    %v387 = vld [vmem:[#allocation4 + $0x9e0] sm:$0xff]
    %v388 = vld [vmem:[#allocation4 + $0x9e8] sm:$0xff]
    %v389 = vld [vmem:[#allocation4 + $0x9f0] sm:$0xff]
    %v390 = vld [vmem:[#allocation4 + $0x9f8] sm:$0xff]
    %v391 = vld [vmem:[#allocation4 + $0xa00] sm:$0xff]
    %v392 = vld [vmem:[#allocation4 + $0xa08] sm:$0xff]
    %v393 = vld [vmem:[#allocation4 + $0xa10] sm:$0xff]
    %v394 = vld [vmem:[#allocation4 + $0xa18] sm:$0xff]
    %v395 = vld [vmem:[#allocation4 + $0xa20] sm:$0xff]
    %v396 = vld [vmem:[#allocation4 + $0xa28] sm:$0xff]
    %v397 = vld [vmem:[#allocation4 + $0xa30] sm:$0xff]
    %v398 = vld [vmem:[#allocation4 + $0xa38] sm:$0xff]
    %v399 = vld [vmem:[#allocation4 + $0xa40] sm:$0xff]
    %v400 = vld [vmem:[#allocation4 + $0xa48] sm:$0xff]
    %v401 = vld [vmem:[#allocation4 + $0xa50] sm:$0xff]
    %v402 = vld [vmem:[#allocation4 + $0xa58] sm:$0xff]
    %v403 = vld [vmem:[#allocation4 + $0xa60] sm:$0xff]
    %v404 = vld [vmem:[#allocation4 + $0xa68] sm:$0xff]
    %v405 = vld [vmem:[#allocation4 + $0xa70] sm:$0xff]
    %v406 = vld [vmem:[#allocation4 + $0xa78] sm:$0xff]
    %v407 = vld [vmem:[#allocation4 + $0xa80] sm:$0xff]
    %v408 = vld [vmem:[#allocation4 + $0xa88] sm:$0xff]
    %v409 = vld [vmem:[#allocation4 + $0xa90] sm:$0xff]
    %v410 = vld [vmem:[#allocation4 + $0xa98] sm:$0xff]
    %v411 = vld [vmem:[#allocation4 + $0xaa0] sm:$0xff]
    %v412 = vld [vmem:[#allocation4 + $0xaa8] sm:$0xff]
    %v413 = vld [vmem:[#allocation4 + $0xab0] sm:$0xff]
    %v414 = vld [vmem:[#allocation4 + $0xab8] sm:$0xff]
    %v415 = vld [vmem:[#allocation4 + $0xac0] sm:$0xff]
    %v416 = vld [vmem:[#allocation4 + $0xac8] sm:$0xff]
    %v417 = vld [vmem:[#allocation4 + $0xad0] sm:$0xff]
    %v418 = vld [vmem:[#allocation4 + $0xad8] sm:$0xff]
    %v419 = vld [vmem:[#allocation4 + $0xae0] sm:$0xff]
    %v420 = vld [vmem:[#allocation4 + $0xae8] sm:$0xff]
    %v421 = vld [vmem:[#allocation4 + $0xaf0] sm:$0xff]
    %v422 = vld [vmem:[#allocation4 + $0xaf8] sm:$0xff]
    %v423 = vld [vmem:[#allocation4 + $0xb00] sm:$0xff]
    %v424 = vld [vmem:[#allocation4 + $0xb08] sm:$0xff]
    %v425 = vld [vmem:[#allocation4 + $0xb10] sm:$0xff]
    %v426 = vld [vmem:[#allocation4 + $0xb18] sm:$0xff]
    %v427 = vld [vmem:[#allocation4 + $0xb20] sm:$0xff]
    %v428 = vld [vmem:[#allocation4 + $0xb28] sm:$0xff]
    %v429 = vld [vmem:[#allocation4 + $0xb30] sm:$0xff]
    %v430 = vld [vmem:[#allocation4 + $0xb38] sm:$0xff]
    %v431 = vld [vmem:[#allocation4 + $0xb40] sm:$0xff]
    %v432 = vld [vmem:[#allocation4 + $0xb48] sm:$0xff]
    %v433 = vld [vmem:[#allocation4 + $0xb50] sm:$0xff]
    %v434 = vld [vmem:[#allocation4 + $0xb58] sm:$0xff]
    %v435 = vld [vmem:[#allocation4 + $0xb60] sm:$0xff]
    %v436 = vld [vmem:[#allocation4 + $0xb68] sm:$0xff]
    %v437 = vld [vmem:[#allocation4 + $0xb70] sm:$0xff]
    %v438 = vld [vmem:[#allocation4 + $0xb78] sm:$0xff]
    %v439 = vld [vmem:[#allocation4 + $0xb80] sm:$0xff]
    %v440 = vld [vmem:[#allocation4 + $0xb88] sm:$0xff]
    %v441 = vld [vmem:[#allocation4 + $0xb90] sm:$0xff]
    %v442 = vld [vmem:[#allocation4 + $0xb98] sm:$0xff]
    %v443 = vld [vmem:[#allocation4 + $0xba0] sm:$0xff]
    %v444 = vld [vmem:[#allocation4 + $0xba8] sm:$0xff]
    %v445 = vld [vmem:[#allocation4 + $0xbb0] sm:$0xff]
    %v446 = vld [vmem:[#allocation4 + $0xbb8] sm:$0xff]
    %v447 = vld [vmem:[#allocation4 + $0xbc0] sm:$0xff]
    %v448 = vld [vmem:[#allocation4 + $0xbc8] sm:$0xff]
    %v449 = vld [vmem:[#allocation4 + $0xbd0] sm:$0xff]
    %v450 = vld [vmem:[#allocation4 + $0xbd8] sm:$0xff]
    %v451 = vld [vmem:[#allocation4 + $0xbe0] sm:$0xff]
    %v452 = vld [vmem:[#allocation4 + $0xbe8] sm:$0xff]
    %v453 = vld [vmem:[#allocation4 + $0xbf0] sm:$0xff]
    %v454 = vld [vmem:[#allocation4 + $0xbf8] sm:$0xff]
    %v455 = vld [vmem:[#allocation4 + $0xc00] sm:$0xff]
    %v456 = vld [vmem:[#allocation4 + $0xc08] sm:$0xff]
    %v457 = vld [vmem:[#allocation4 + $0xc10] sm:$0xff]
    %v458 = vld [vmem:[#allocation4 + $0xc18] sm:$0xff]
    %v459 = vld [vmem:[#allocation4 + $0xc20] sm:$0xff]
    %v460 = vld [vmem:[#allocation4 + $0xc28] sm:$0xff]
    %v461 = vld [vmem:[#allocation4 + $0xc30] sm:$0xff]
    %v462 = vld [vmem:[#allocation4 + $0xc38] sm:$0xff]
    %v463 = vld [vmem:[#allocation4 + $0xc40] sm:$0xff]
    %v464 = vld [vmem:[#allocation4 + $0xc48] sm:$0xff]
    %v465 = vld [vmem:[#allocation4 + $0xc50] sm:$0xff]
    %v466 = vld [vmem:[#allocation4 + $0xc58] sm:$0xff]
    %v467 = vld [vmem:[#allocation4 + $0xc60] sm:$0xff]
    %v468 = vld [vmem:[#allocation4 + $0xc68] sm:$0xff]
    %v469 = vld [vmem:[#allocation4 + $0xc70] sm:$0xff]
    %v470 = vld [vmem:[#allocation4 + $0xc78] sm:$0xff]
    %v471 = vld [vmem:[#allocation4 + $0xc80] sm:$0xff]
    %v472 = vld [vmem:[#allocation4 + $0xc88] sm:$0xff]
    %v473 = vld [vmem:[#allocation4 + $0xc90] sm:$0xff]
    %v474 = vld [vmem:[#allocation4 + $0xc98] sm:$0xff]
    %v475 = vld [vmem:[#allocation4 + $0xca0] sm:$0xff]
    %v476 = vld [vmem:[#allocation4 + $0xca8] sm:$0xff]
    %v477 = vld [vmem:[#allocation4 + $0xcb0] sm:$0xff]
    %v478 = vld [vmem:[#allocation4 + $0xcb8] sm:$0xff]
    %v479 = vld [vmem:[#allocation4 + $0xcc0] sm:$0xff]
    %v480 = vld [vmem:[#allocation4 + $0xcc8] sm:$0xff]
    %v481 = vld [vmem:[#allocation4 + $0xcd0] sm:$0xff]
    %v482 = vld [vmem:[#allocation4 + $0xcd8] sm:$0xff]
    %v483 = vld [vmem:[#allocation4 + $0xce0] sm:$0xff]
    %v484 = vld [vmem:[#allocation4 + $0xce8] sm:$0xff]
    %v485 = vld [vmem:[#allocation4 + $0xcf0] sm:$0xff]
    %v486 = vld [vmem:[#allocation4 + $0xcf8] sm:$0xff]
    %v487 = vld [vmem:[#allocation4 + $0xd00] sm:$0xff]
    %v488 = vld [vmem:[#allocation4 + $0xd08] sm:$0xff]
    %v489 = vld [vmem:[#allocation4 + $0xd10] sm:$0xff]
    %v490 = vld [vmem:[#allocation4 + $0xd18] sm:$0xff]
    %v491 = vld [vmem:[#allocation4 + $0xd20] sm:$0xff]
    %v492 = vld [vmem:[#allocation4 + $0xd28] sm:$0xff]
    %v493 = vld [vmem:[#allocation4 + $0xd30] sm:$0xff]
    %v494 = vld [vmem:[#allocation4 + $0xd38] sm:$0xff]
    %v495 = vld [vmem:[#allocation4 + $0xd40] sm:$0xff]
    %v496 = vld [vmem:[#allocation4 + $0xd48] sm:$0xff]
    %v497 = vld [vmem:[#allocation4 + $0xd50] sm:$0xff]
    %v498 = vld [vmem:[#allocation4 + $0xd58] sm:$0xff]
    %v499 = vld [vmem:[#allocation4 + $0xd60] sm:$0xff]
    %v500 = vld [vmem:[#allocation4 + $0xd68] sm:$0xff]
    %v501 = vld [vmem:[#allocation4 + $0xd70] sm:$0xff]
    %v502 = vld [vmem:[#allocation4 + $0xd78] sm:$0xff]
    %v503 = vld [vmem:[#allocation4 + $0xd80] sm:$0xff]
    %v504 = vld [vmem:[#allocation4 + $0xd88] sm:$0xff]
    %v505 = vld [vmem:[#allocation4 + $0xd90] sm:$0xff]
    %v506 = vld [vmem:[#allocation4 + $0xd98] sm:$0xff]
    %v507 = vld [vmem:[#allocation4 + $0xda0] sm:$0xff]
    %v508 = vld [vmem:[#allocation4 + $0xda8] sm:$0xff]
    %v509 = vld [vmem:[#allocation4 + $0xdb0] sm:$0xff]
    %v510 = vld [vmem:[#allocation4 + $0xdb8] sm:$0xff]
    %v511 = vld [vmem:[#allocation4 + $0xdc0] sm:$0xff]
    %v512 = vld [vmem:[#allocation4 + $0xdc8] sm:$0xff]
    %v513 = vld [vmem:[#allocation4 + $0xdd0] sm:$0xff]
    %v514 = vld [vmem:[#allocation4 + $0xdd8] sm:$0xff]
    %v515 = vld [vmem:[#allocation4 + $0xde0] sm:$0xff]
    %v516 = vld [vmem:[#allocation4 + $0xde8] sm:$0xff]
    %v517 = vld [vmem:[#allocation4 + $0xdf0] sm:$0xff]
    %v518 = vld [vmem:[#allocation4 + $0xdf8] sm:$0xff]
    %v519 = vld [vmem:[#allocation4 + $0xe00] sm:$0xff]
    %v520 = vld [vmem:[#allocation4 + $0xe08] sm:$0xff]
    %v521 = vld [vmem:[#allocation4 + $0xe10] sm:$0xff]
    %v522 = vld [vmem:[#allocation4 + $0xe18] sm:$0xff]
    %v523 = vld [vmem:[#allocation4 + $0xe20] sm:$0xff]
    %v524 = vld [vmem:[#allocation4 + $0xe28] sm:$0xff]
    %v525 = vld [vmem:[#allocation4 + $0xe30] sm:$0xff]
    %v526 = vld [vmem:[#allocation4 + $0xe38] sm:$0xff]
    %v527 = vld [vmem:[#allocation4 + $0xe40] sm:$0xff]
    %v528 = vld [vmem:[#allocation4 + $0xe48] sm:$0xff]
    %v529 = vld [vmem:[#allocation4 + $0xe50] sm:$0xff]
    %v530 = vld [vmem:[#allocation4 + $0xe58] sm:$0xff]
    %v531 = vld [vmem:[#allocation4 + $0xe60] sm:$0xff]
    %v532 = vld [vmem:[#allocation4 + $0xe68] sm:$0xff]
    %v533 = vld [vmem:[#allocation4 + $0xe70] sm:$0xff]
    %v534 = vld [vmem:[#allocation4 + $0xe78] sm:$0xff]
    %v535 = vld [vmem:[#allocation4 + $0xe80] sm:$0xff]
    %v536 = vld [vmem:[#allocation4 + $0xe88] sm:$0xff]
    %v537 = vld [vmem:[#allocation4 + $0xe90] sm:$0xff]
    %v538 = vld [vmem:[#allocation4 + $0xe98] sm:$0xff]
    %v539 = vld [vmem:[#allocation4 + $0xea0] sm:$0xff]
    %v540 = vld [vmem:[#allocation4 + $0xea8] sm:$0xff]
    %v541 = vld [vmem:[#allocation4 + $0xeb0] sm:$0xff]
    %v542 = vld [vmem:[#allocation4 + $0xeb8] sm:$0xff]
    %v543 = vld [vmem:[#allocation4 + $0xec0] sm:$0xff]
    %v544 = vld [vmem:[#allocation4 + $0xec8] sm:$0xff]
    %v545 = vld [vmem:[#allocation4 + $0xed0] sm:$0xff]
    %v546 = vld [vmem:[#allocation4 + $0xed8] sm:$0xff]
    %v547 = vld [vmem:[#allocation4 + $0xee0] sm:$0xff]
    %v548 = vld [vmem:[#allocation4 + $0xee8] sm:$0xff]
    %v549 = vld [vmem:[#allocation4 + $0xef0] sm:$0xff]
    %v550 = vld [vmem:[#allocation4 + $0xef8] sm:$0xff]
    %v551 = vld [vmem:[#allocation4 + $0xf00] sm:$0xff]
    %v552 = vld [vmem:[#allocation4 + $0xf08] sm:$0xff]
    %v553 = vld [vmem:[#allocation4 + $0xf10] sm:$0xff]
    %v554 = vld [vmem:[#allocation4 + $0xf18] sm:$0xff]
    %v555 = vld [vmem:[#allocation4 + $0xf20] sm:$0xff]
    %v556 = vld [vmem:[#allocation4 + $0xf28] sm:$0xff]
    %v557 = vld [vmem:[#allocation4 + $0xf30] sm:$0xff]
    %v558 = vld [vmem:[#allocation4 + $0xf38] sm:$0xff]
    %v559 = vld [vmem:[#allocation4 + $0xf40] sm:$0xff]
    %v560 = vld [vmem:[#allocation4 + $0xf48] sm:$0xff]
    %v561 = vld [vmem:[#allocation4 + $0xf50] sm:$0xff]
    %v562 = vld [vmem:[#allocation4 + $0xf58] sm:$0xff]
    %v563 = vld [vmem:[#allocation4 + $0xf60] sm:$0xff]
    %v564 = vld [vmem:[#allocation4 + $0xf68] sm:$0xff]
    %v565 = vld [vmem:[#allocation4 + $0xf70] sm:$0xff]
    %v566 = vld [vmem:[#allocation4 + $0xf78] sm:$0xff]
    %v567 = vld [vmem:[#allocation4 + $0xf80] sm:$0xff]
    %v568 = vld [vmem:[#allocation4 + $0xf88] sm:$0xff]
    %v569 = vld [vmem:[#allocation4 + $0xf90] sm:$0xff]
    %v570 = vld [vmem:[#allocation4 + $0xf98] sm:$0xff]
    %v571 = vld [vmem:[#allocation4 + $0xfa0] sm:$0xff]
    %v572 = vld [vmem:[#allocation4 + $0xfa8] sm:$0xff]
    %v573 = vld [vmem:[#allocation4 + $0xfb0] sm:$0xff]
    %v574 = vld [vmem:[#allocation4 + $0xfb8] sm:$0xff]
    %v575 = vld [vmem:[#allocation4 + $0xfc0] sm:$0xff]
    %v576 = vld [vmem:[#allocation4 + $0xfc8] sm:$0xff]
    %v577 = vld [vmem:[#allocation4 + $0xfd0] sm:$0xff]
    %v578 = vld [vmem:[#allocation4 + $0xfd8] sm:$0xff]
    %v579 = vld [vmem:[#allocation4 + $0xfe0] sm:$0xff]
    %v580 = vld [vmem:[#allocation4 + $0xfe8] sm:$0xff]
    %v581 = vld [vmem:[#allocation4 + $0xff0] sm:$0xff]
    %v582 = vld [vmem:[#allocation4 + $0xff8] sm:$0xff]
    %v583 = vld [vmem:[#allocation6] sm:$0xff]
    %v584 = vld [vmem:[#allocation6 + $0x8] sm:$0xff]
    %v585 = vld [vmem:[#allocation6 + $0x10] sm:$0xff]
    %v586 = vld [vmem:[#allocation6 + $0x18] sm:$0xff]
    %v587 = vld [vmem:[#allocation6 + $0x20] sm:$0xff]
    %v588 = vld [vmem:[#allocation6 + $0x28] sm:$0xff]
    %v589 = vld [vmem:[#allocation6 + $0x30] sm:$0xff]
    %v590 = vld [vmem:[#allocation6 + $0x38] sm:$0xff]
    %v591 = vld [vmem:[#allocation6 + $0x40] sm:$0xff]
    %v592 = vld [vmem:[#allocation6 + $0x48] sm:$0xff]
    %v593 = vld [vmem:[#allocation6 + $0x50] sm:$0xff]
    %v594 = vld [vmem:[#allocation6 + $0x58] sm:$0xff]
    %v595 = vld [vmem:[#allocation6 + $0x60] sm:$0xff]
    %v596 = vld [vmem:[#allocation6 + $0x68] sm:$0xff]
    %v597 = vld [vmem:[#allocation6 + $0x70] sm:$0xff]
    %v598 = vld [vmem:[#allocation6 + $0x78] sm:$0xff]
    %v599 = vld [vmem:[#allocation6 + $0x80] sm:$0xff]
    %v600 = vld [vmem:[#allocation6 + $0x88] sm:$0xff]
    %v601 = vld [vmem:[#allocation6 + $0x90] sm:$0xff]
    %v602 = vld [vmem:[#allocation6 + $0x98] sm:$0xff]
    %v603 = vld [vmem:[#allocation6 + $0xa0] sm:$0xff]
    %v604 = vld [vmem:[#allocation6 + $0xa8] sm:$0xff]
    %v605 = vld [vmem:[#allocation6 + $0xb0] sm:$0xff]
    %v606 = vld [vmem:[#allocation6 + $0xb8] sm:$0xff]
    %v607 = vld [vmem:[#allocation6 + $0xc0] sm:$0xff]
    %v608 = vld [vmem:[#allocation6 + $0xc8] sm:$0xff]
    %v609 = vld [vmem:[#allocation6 + $0xd0] sm:$0xff]
    %v610 = vld [vmem:[#allocation6 + $0xd8] sm:$0xff]
    %v611 = vld [vmem:[#allocation6 + $0xe0] sm:$0xff]
    %v612 = vld [vmem:[#allocation6 + $0xe8] sm:$0xff]
    %v613 = vld [vmem:[#allocation6 + $0xf0] sm:$0xff]
    %v614 = vld [vmem:[#allocation6 + $0xf8] sm:$0xff]
    %v615 = vld [vmem:[#allocation6 + $0x100] sm:$0xff]
    %v616 = vld [vmem:[#allocation6 + $0x108] sm:$0xff]
    %v617 = vld [vmem:[#allocation6 + $0x110] sm:$0xff]
    %v618 = vld [vmem:[#allocation6 + $0x118] sm:$0xff]
    %v619 = vld [vmem:[#allocation6 + $0x120] sm:$0xff]
    %v620 = vld [vmem:[#allocation6 + $0x128] sm:$0xff]
    %v621 = vld [vmem:[#allocation6 + $0x130] sm:$0xff]
    %v622 = vld [vmem:[#allocation6 + $0x138] sm:$0xff]
    %v623 = vld [vmem:[#allocation6 + $0x140] sm:$0xff]
    %v624 = vld [vmem:[#allocation6 + $0x148] sm:$0xff]
    %v625 = vld [vmem:[#allocation6 + $0x150] sm:$0xff]
    %v626 = vld [vmem:[#allocation6 + $0x158] sm:$0xff]
    %v627 = vld [vmem:[#allocation6 + $0x160] sm:$0xff]
    %v628 = vld [vmem:[#allocation6 + $0x168] sm:$0xff]
    %v629 = vld [vmem:[#allocation6 + $0x170] sm:$0xff]
    %v630 = vld [vmem:[#allocation6 + $0x178] sm:$0xff]
    %v631 = vld [vmem:[#allocation6 + $0x180] sm:$0xff]
    %v632 = vld [vmem:[#allocation6 + $0x188] sm:$0xff]
    %v633 = vld [vmem:[#allocation6 + $0x190] sm:$0xff]
    %v634 = vld [vmem:[#allocation6 + $0x198] sm:$0xff]
    %v635 = vld [vmem:[#allocation6 + $0x1a0] sm:$0xff]
    %v636 = vld [vmem:[#allocation6 + $0x1a8] sm:$0xff]
    %v637 = vld [vmem:[#allocation6 + $0x1b0] sm:$0xff]
    %v638 = vld [vmem:[#allocation6 + $0x1b8] sm:$0xff]
    %v639 = vld [vmem:[#allocation6 + $0x1c0] sm:$0xff]
    %v640 = vld [vmem:[#allocation6 + $0x1c8] sm:$0xff]
    %v641 = vld [vmem:[#allocation6 + $0x1d0] sm:$0xff]
    %v642 = vld [vmem:[#allocation6 + $0x1d8] sm:$0xff]
    %v643 = vld [vmem:[#allocation6 + $0x1e0] sm:$0xff]
    %v644 = vld [vmem:[#allocation6 + $0x1e8] sm:$0xff]
    %v645 = vld [vmem:[#allocation6 + $0x1f0] sm:$0xff]
    %v646 = vld [vmem:[#allocation6 + $0x1f8] sm:$0xff]
    %v647 = vld [vmem:[%s5] sm:$0xff]
    %v648 = vld [vmem:[%s5 + $0x8] sm:$0xff]
    %650 = vset.pattern.permute.xlu0 0
    %651 = vperm.xlu0 %650, %v647
    %v652 = vpop.permute.xlu0 %651
    %655 = vset.pattern.permute.xlu0 0
    %656 = vperm.xlu0 %655, %v648
    %v657 = vpop.permute.xlu0 %656
    %659 = vmatpush.xpose.msra.mxu0 %v551
    %660 = vmatpush.xpose.msra.mxu0 %v519
    %661 = vmatpush.xpose.msra.mxu0 %v487
    %662 = vmatpush.xpose.msra.mxu0 %v455
    %663 = vmatpush.xpose.msra.mxu0 %v423
    %664 = vmatpush.xpose.msra.mxu0 %v391
    %665 = vmatpush.xpose.msra.mxu0 %v359
    %666 = vmatpush.xpose.msra.mxu0 %v327
    %667 = vmatpush.xpose.msra.mxu0 %v295
    %668 = vmatpush.xpose.msra.mxu0 %v263
    %669 = vmatpush.xpose.msra.mxu0 %v231
    %670 = vmatpush.xpose.msra.mxu0 %v199
    %671 = vmatpush.xpose.msra.mxu0 %v167
    %672 = vmatpush.xpose.msra.mxu0 %v135
    %673 = vmatpush.xpose.msra.mxu0 %v103
    %674 = vmatpush.xpose.msra.mxu0 %v71
    %675 = vmatmul.f32.gmra.mxu0 %v583
    %v676 = vpop.f32.mrf.mxu0
    %v677 = vadd.f32 %v652, %v676
    %678 = vmatmul.f32.gmra.mxu0 %v615
    %v679 = vpop.f32.mrf.mxu0
    %v680 = vadd.f32 %v657, %v679
    %681 = vdwg.mxu0
    %682 = vmatpush.xpose.msra.mxu0 %v552
    %683 = vmatpush.xpose.msra.mxu0 %v520
    %684 = vmatpush.xpose.msra.mxu0 %v488
    %685 = vmatpush.xpose.msra.mxu0 %v456
    %686 = vmatpush.xpose.msra.mxu0 %v424
    %687 = vmatpush.xpose.msra.mxu0 %v392
    %688 = vmatpush.xpose.msra.mxu0 %v360
    %689 = vmatpush.xpose.msra.mxu0 %v328
    %690 = vmatpush.xpose.msra.mxu0 %v296
    %691 = vmatpush.xpose.msra.mxu0 %v264
    %692 = vmatpush.xpose.msra.mxu0 %v232
    %693 = vmatpush.xpose.msra.mxu0 %v200
    %694 = vmatpush.xpose.msra.mxu0 %v168
    %695 = vmatpush.xpose.msra.mxu0 %v136
    %696 = vmatpush.xpose.msra.mxu0 %v104
    %697 = vmatpush.xpose.msra.mxu0 %v72
    %698 = vmatmul.f32.gmra.mxu0 %v584
    %v699 = vpop.f32.mrf.mxu0
    %v700 = vadd.f32 %v677, %v699
    %701 = vmatmul.f32.gmra.mxu0 %v616
    %v702 = vpop.f32.mrf.mxu0
    %v703 = vadd.f32 %v680, %v702
    %704 = vdwg.mxu0
    %705 = vmatpush.xpose.msra.mxu0 %v553
    %706 = vmatpush.xpose.msra.mxu0 %v521
    %707 = vmatpush.xpose.msra.mxu0 %v489
    %708 = vmatpush.xpose.msra.mxu0 %v457
    %709 = vmatpush.xpose.msra.mxu0 %v425
    %710 = vmatpush.xpose.msra.mxu0 %v393
    %711 = vmatpush.xpose.msra.mxu0 %v361
    %712 = vmatpush.xpose.msra.mxu0 %v329
    %713 = vmatpush.xpose.msra.mxu0 %v297
    %714 = vmatpush.xpose.msra.mxu0 %v265
    %715 = vmatpush.xpose.msra.mxu0 %v233
    %716 = vmatpush.xpose.msra.mxu0 %v201
    %717 = vmatpush.xpose.msra.mxu0 %v169
    %718 = vmatpush.xpose.msra.mxu0 %v137
    %719 = vmatpush.xpose.msra.mxu0 %v105
    %720 = vmatpush.xpose.msra.mxu0 %v73
    %721 = vmatmul.f32.gmra.mxu0 %v585
    %v722 = vpop.f32.mrf.mxu0
    %v723 = vadd.f32 %v700, %v722
    %724 = vmatmul.f32.gmra.mxu0 %v617
    %v725 = vpop.f32.mrf.mxu0
    %v726 = vadd.f32 %v703, %v725
    %727 = vdwg.mxu0
    %728 = vmatpush.xpose.msra.mxu0 %v554
    %729 = vmatpush.xpose.msra.mxu0 %v522
    %730 = vmatpush.xpose.msra.mxu0 %v490
    %731 = vmatpush.xpose.msra.mxu0 %v458
    %732 = vmatpush.xpose.msra.mxu0 %v426
    %733 = vmatpush.xpose.msra.mxu0 %v394
    %734 = vmatpush.xpose.msra.mxu0 %v362
    %735 = vmatpush.xpose.msra.mxu0 %v330
    %736 = vmatpush.xpose.msra.mxu0 %v298
    %737 = vmatpush.xpose.msra.mxu0 %v266
    %738 = vmatpush.xpose.msra.mxu0 %v234
    %739 = vmatpush.xpose.msra.mxu0 %v202
    %740 = vmatpush.xpose.msra.mxu0 %v170
    %741 = vmatpush.xpose.msra.mxu0 %v138
    %742 = vmatpush.xpose.msra.mxu0 %v106
    %743 = vmatpush.xpose.msra.mxu0 %v74
    %744 = vmatmul.f32.gmra.mxu0 %v586
    %v745 = vpop.f32.mrf.mxu0
    %v746 = vadd.f32 %v723, %v745
    %747 = vmatmul.f32.gmra.mxu0 %v618
    %v748 = vpop.f32.mrf.mxu0
    %v749 = vadd.f32 %v726, %v748
    %750 = vdwg.mxu0
    %751 = vmatpush.xpose.msra.mxu0 %v555
    %752 = vmatpush.xpose.msra.mxu0 %v523
    %753 = vmatpush.xpose.msra.mxu0 %v491
    %754 = vmatpush.xpose.msra.mxu0 %v459
    %755 = vmatpush.xpose.msra.mxu0 %v427
    %756 = vmatpush.xpose.msra.mxu0 %v395
    %757 = vmatpush.xpose.msra.mxu0 %v363
    %758 = vmatpush.xpose.msra.mxu0 %v331
    %759 = vmatpush.xpose.msra.mxu0 %v299
    %760 = vmatpush.xpose.msra.mxu0 %v267
    %761 = vmatpush.xpose.msra.mxu0 %v235
    %762 = vmatpush.xpose.msra.mxu0 %v203
    %763 = vmatpush.xpose.msra.mxu0 %v171
    %764 = vmatpush.xpose.msra.mxu0 %v139
    %765 = vmatpush.xpose.msra.mxu0 %v107
    %766 = vmatpush.xpose.msra.mxu0 %v75
    %767 = vmatmul.f32.gmra.mxu0 %v587
    %v768 = vpop.f32.mrf.mxu0
    %v769 = vadd.f32 %v746, %v768
    %770 = vmatmul.f32.gmra.mxu0 %v619
    %v771 = vpop.f32.mrf.mxu0
    %v772 = vadd.f32 %v749, %v771
    %773 = vdwg.mxu0
    %774 = vmatpush.xpose.msra.mxu0 %v556
    %775 = vmatpush.xpose.msra.mxu0 %v524
    %776 = vmatpush.xpose.msra.mxu0 %v492
    %777 = vmatpush.xpose.msra.mxu0 %v460
    %778 = vmatpush.xpose.msra.mxu0 %v428
    %779 = vmatpush.xpose.msra.mxu0 %v396
    %780 = vmatpush.xpose.msra.mxu0 %v364
    %781 = vmatpush.xpose.msra.mxu0 %v332
    %782 = vmatpush.xpose.msra.mxu0 %v300
    %783 = vmatpush.xpose.msra.mxu0 %v268
    %784 = vmatpush.xpose.msra.mxu0 %v236
    %785 = vmatpush.xpose.msra.mxu0 %v204
    %786 = vmatpush.xpose.msra.mxu0 %v172
    %787 = vmatpush.xpose.msra.mxu0 %v140
    %788 = vmatpush.xpose.msra.mxu0 %v108
    %789 = vmatpush.xpose.msra.mxu0 %v76
    %790 = vmatmul.f32.gmra.mxu0 %v588
    %v791 = vpop.f32.mrf.mxu0
    %v792 = vadd.f32 %v769, %v791
    %793 = vmatmul.f32.gmra.mxu0 %v620
    %v794 = vpop.f32.mrf.mxu0
    %v795 = vadd.f32 %v772, %v794
    %796 = vdwg.mxu0
    %797 = vmatpush.xpose.msra.mxu0 %v557
    %798 = vmatpush.xpose.msra.mxu0 %v525
    %799 = vmatpush.xpose.msra.mxu0 %v493
    %800 = vmatpush.xpose.msra.mxu0 %v461
    %801 = vmatpush.xpose.msra.mxu0 %v429
    %802 = vmatpush.xpose.msra.mxu0 %v397
    %803 = vmatpush.xpose.msra.mxu0 %v365
    %804 = vmatpush.xpose.msra.mxu0 %v333
    %805 = vmatpush.xpose.msra.mxu0 %v301
    %806 = vmatpush.xpose.msra.mxu0 %v269
    %807 = vmatpush.xpose.msra.mxu0 %v237
    %808 = vmatpush.xpose.msra.mxu0 %v205
    %809 = vmatpush.xpose.msra.mxu0 %v173
    %810 = vmatpush.xpose.msra.mxu0 %v141
    %811 = vmatpush.xpose.msra.mxu0 %v109
    %812 = vmatpush.xpose.msra.mxu0 %v77
    %813 = vmatmul.f32.gmra.mxu0 %v589
    %v814 = vpop.f32.mrf.mxu0
    %v815 = vadd.f32 %v792, %v814
    %816 = vmatmul.f32.gmra.mxu0 %v621
    %v817 = vpop.f32.mrf.mxu0
    %v818 = vadd.f32 %v795, %v817
    %819 = vdwg.mxu0
    %820 = vmatpush.xpose.msra.mxu0 %v558
    %821 = vmatpush.xpose.msra.mxu0 %v526
    %822 = vmatpush.xpose.msra.mxu0 %v494
    %823 = vmatpush.xpose.msra.mxu0 %v462
    %824 = vmatpush.xpose.msra.mxu0 %v430
    %825 = vmatpush.xpose.msra.mxu0 %v398
    %826 = vmatpush.xpose.msra.mxu0 %v366
    %827 = vmatpush.xpose.msra.mxu0 %v334
    %828 = vmatpush.xpose.msra.mxu0 %v302
    %829 = vmatpush.xpose.msra.mxu0 %v270
    %830 = vmatpush.xpose.msra.mxu0 %v238
    %831 = vmatpush.xpose.msra.mxu0 %v206
    %832 = vmatpush.xpose.msra.mxu0 %v174
    %833 = vmatpush.xpose.msra.mxu0 %v142
    %834 = vmatpush.xpose.msra.mxu0 %v110
    %835 = vmatpush.xpose.msra.mxu0 %v78
    %836 = vmatmul.f32.gmra.mxu0 %v590
    %v837 = vpop.f32.mrf.mxu0
    %v838 = vadd.f32 %v815, %v837
    %839 = vmatmul.f32.gmra.mxu0 %v622
    %v840 = vpop.f32.mrf.mxu0
    %v841 = vadd.f32 %v818, %v840
    %842 = vdwg.mxu0
    %843 = vmatpush.xpose.msra.mxu0 %v559
    %844 = vmatpush.xpose.msra.mxu0 %v527
    %845 = vmatpush.xpose.msra.mxu0 %v495
    %846 = vmatpush.xpose.msra.mxu0 %v463
    %847 = vmatpush.xpose.msra.mxu0 %v431
    %848 = vmatpush.xpose.msra.mxu0 %v399
    %849 = vmatpush.xpose.msra.mxu0 %v367
    %850 = vmatpush.xpose.msra.mxu0 %v335
    %851 = vmatpush.xpose.msra.mxu0 %v303
    %852 = vmatpush.xpose.msra.mxu0 %v271
    %853 = vmatpush.xpose.msra.mxu0 %v239
    %854 = vmatpush.xpose.msra.mxu0 %v207
    %855 = vmatpush.xpose.msra.mxu0 %v175
    %856 = vmatpush.xpose.msra.mxu0 %v143
    %857 = vmatpush.xpose.msra.mxu0 %v111
    %858 = vmatpush.xpose.msra.mxu0 %v79
    %859 = vmatmul.f32.gmra.mxu0 %v591
    %v860 = vpop.f32.mrf.mxu0
    %v861 = vadd.f32 %v838, %v860
    %862 = vmatmul.f32.gmra.mxu0 %v623
    %v863 = vpop.f32.mrf.mxu0
    %v864 = vadd.f32 %v841, %v863
    %865 = vdwg.mxu0
    %866 = vmatpush.xpose.msra.mxu0 %v560
    %867 = vmatpush.xpose.msra.mxu0 %v528
    %868 = vmatpush.xpose.msra.mxu0 %v496
    %869 = vmatpush.xpose.msra.mxu0 %v464
    %870 = vmatpush.xpose.msra.mxu0 %v432
    %871 = vmatpush.xpose.msra.mxu0 %v400
    %872 = vmatpush.xpose.msra.mxu0 %v368
    %873 = vmatpush.xpose.msra.mxu0 %v336
    %874 = vmatpush.xpose.msra.mxu0 %v304
    %875 = vmatpush.xpose.msra.mxu0 %v272
    %876 = vmatpush.xpose.msra.mxu0 %v240
    %877 = vmatpush.xpose.msra.mxu0 %v208
    %878 = vmatpush.xpose.msra.mxu0 %v176
    %879 = vmatpush.xpose.msra.mxu0 %v144
    %880 = vmatpush.xpose.msra.mxu0 %v112
    %881 = vmatpush.xpose.msra.mxu0 %v80
    %882 = vmatmul.f32.gmra.mxu0 %v592
    %v883 = vpop.f32.mrf.mxu0
    %v884 = vadd.f32 %v861, %v883
    %885 = vmatmul.f32.gmra.mxu0 %v624
    %v886 = vpop.f32.mrf.mxu0
    %v887 = vadd.f32 %v864, %v886
    %888 = vdwg.mxu0
    %889 = vmatpush.xpose.msra.mxu0 %v561
    %890 = vmatpush.xpose.msra.mxu0 %v529
    %891 = vmatpush.xpose.msra.mxu0 %v497
    %892 = vmatpush.xpose.msra.mxu0 %v465
    %893 = vmatpush.xpose.msra.mxu0 %v433
    %894 = vmatpush.xpose.msra.mxu0 %v401
    %895 = vmatpush.xpose.msra.mxu0 %v369
    %896 = vmatpush.xpose.msra.mxu0 %v337
    %897 = vmatpush.xpose.msra.mxu0 %v305
    %898 = vmatpush.xpose.msra.mxu0 %v273
    %899 = vmatpush.xpose.msra.mxu0 %v241
    %900 = vmatpush.xpose.msra.mxu0 %v209
    %901 = vmatpush.xpose.msra.mxu0 %v177
    %902 = vmatpush.xpose.msra.mxu0 %v145
    %903 = vmatpush.xpose.msra.mxu0 %v113
    %904 = vmatpush.xpose.msra.mxu0 %v81
    %905 = vmatmul.f32.gmra.mxu0 %v593
    %v906 = vpop.f32.mrf.mxu0
    %v907 = vadd.f32 %v884, %v906
    %908 = vmatmul.f32.gmra.mxu0 %v625
    %v909 = vpop.f32.mrf.mxu0
    %v910 = vadd.f32 %v887, %v909
    %911 = vdwg.mxu0
    %912 = vmatpush.xpose.msra.mxu0 %v562
    %913 = vmatpush.xpose.msra.mxu0 %v530
    %914 = vmatpush.xpose.msra.mxu0 %v498
    %915 = vmatpush.xpose.msra.mxu0 %v466
    %916 = vmatpush.xpose.msra.mxu0 %v434
    %917 = vmatpush.xpose.msra.mxu0 %v402
    %918 = vmatpush.xpose.msra.mxu0 %v370
    %919 = vmatpush.xpose.msra.mxu0 %v338
    %920 = vmatpush.xpose.msra.mxu0 %v306
    %921 = vmatpush.xpose.msra.mxu0 %v274
    %922 = vmatpush.xpose.msra.mxu0 %v242
    %923 = vmatpush.xpose.msra.mxu0 %v210
    %924 = vmatpush.xpose.msra.mxu0 %v178
    %925 = vmatpush.xpose.msra.mxu0 %v146
    %926 = vmatpush.xpose.msra.mxu0 %v114
    %927 = vmatpush.xpose.msra.mxu0 %v82
    %928 = vmatmul.f32.gmra.mxu0 %v594
    %v929 = vpop.f32.mrf.mxu0
    %v930 = vadd.f32 %v907, %v929
    %931 = vmatmul.f32.gmra.mxu0 %v626
    %v932 = vpop.f32.mrf.mxu0
    %v933 = vadd.f32 %v910, %v932
    %934 = vdwg.mxu0
    %935 = vmatpush.xpose.msra.mxu0 %v563
    %936 = vmatpush.xpose.msra.mxu0 %v531
    %937 = vmatpush.xpose.msra.mxu0 %v499
    %938 = vmatpush.xpose.msra.mxu0 %v467
    %939 = vmatpush.xpose.msra.mxu0 %v435
    %940 = vmatpush.xpose.msra.mxu0 %v403
    %941 = vmatpush.xpose.msra.mxu0 %v371
    %942 = vmatpush.xpose.msra.mxu0 %v339
    %943 = vmatpush.xpose.msra.mxu0 %v307
    %944 = vmatpush.xpose.msra.mxu0 %v275
    %945 = vmatpush.xpose.msra.mxu0 %v243
    %946 = vmatpush.xpose.msra.mxu0 %v211
    %947 = vmatpush.xpose.msra.mxu0 %v179
    %948 = vmatpush.xpose.msra.mxu0 %v147
    %949 = vmatpush.xpose.msra.mxu0 %v115
    %950 = vmatpush.xpose.msra.mxu0 %v83
    %951 = vmatmul.f32.gmra.mxu0 %v595
    %v952 = vpop.f32.mrf.mxu0
    %v953 = vadd.f32 %v930, %v952
    %954 = vmatmul.f32.gmra.mxu0 %v627
    %v955 = vpop.f32.mrf.mxu0
    %v956 = vadd.f32 %v933, %v955
    %957 = vdwg.mxu0
    %958 = vmatpush.xpose.msra.mxu0 %v564
    %959 = vmatpush.xpose.msra.mxu0 %v532
    %960 = vmatpush.xpose.msra.mxu0 %v500
    %961 = vmatpush.xpose.msra.mxu0 %v468
    %962 = vmatpush.xpose.msra.mxu0 %v436
    %963 = vmatpush.xpose.msra.mxu0 %v404
    %964 = vmatpush.xpose.msra.mxu0 %v372
    %965 = vmatpush.xpose.msra.mxu0 %v340
    %966 = vmatpush.xpose.msra.mxu0 %v308
    %967 = vmatpush.xpose.msra.mxu0 %v276
    %968 = vmatpush.xpose.msra.mxu0 %v244
    %969 = vmatpush.xpose.msra.mxu0 %v212
    %970 = vmatpush.xpose.msra.mxu0 %v180
    %971 = vmatpush.xpose.msra.mxu0 %v148
    %972 = vmatpush.xpose.msra.mxu0 %v116
    %973 = vmatpush.xpose.msra.mxu0 %v84
    %974 = vmatmul.f32.gmra.mxu0 %v596
    %v975 = vpop.f32.mrf.mxu0
    %v976 = vadd.f32 %v953, %v975
    %977 = vmatmul.f32.gmra.mxu0 %v628
    %v978 = vpop.f32.mrf.mxu0
    %v979 = vadd.f32 %v956, %v978
    %980 = vdwg.mxu0
    %981 = vmatpush.xpose.msra.mxu0 %v565
    %982 = vmatpush.xpose.msra.mxu0 %v533
    %983 = vmatpush.xpose.msra.mxu0 %v501
    %984 = vmatpush.xpose.msra.mxu0 %v469
    %985 = vmatpush.xpose.msra.mxu0 %v437
    %986 = vmatpush.xpose.msra.mxu0 %v405
    %987 = vmatpush.xpose.msra.mxu0 %v373
    %988 = vmatpush.xpose.msra.mxu0 %v341
    %989 = vmatpush.xpose.msra.mxu0 %v309
    %990 = vmatpush.xpose.msra.mxu0 %v277
    %991 = vmatpush.xpose.msra.mxu0 %v245
    %992 = vmatpush.xpose.msra.mxu0 %v213
    %993 = vmatpush.xpose.msra.mxu0 %v181
    %994 = vmatpush.xpose.msra.mxu0 %v149
    %995 = vmatpush.xpose.msra.mxu0 %v117
    %996 = vmatpush.xpose.msra.mxu0 %v85
    %997 = vmatmul.f32.gmra.mxu0 %v597
    %v998 = vpop.f32.mrf.mxu0
    %v999 = vadd.f32 %v976, %v998
    %1000 = vmatmul.f32.gmra.mxu0 %v629
    %v1001 = vpop.f32.mrf.mxu0
    %v1002 = vadd.f32 %v979, %v1001
    %1003 = vdwg.mxu0
    %1004 = vmatpush.xpose.msra.mxu0 %v566
    %1005 = vmatpush.xpose.msra.mxu0 %v534
    %1006 = vmatpush.xpose.msra.mxu0 %v502
    %1007 = vmatpush.xpose.msra.mxu0 %v470
    %1008 = vmatpush.xpose.msra.mxu0 %v438
    %1009 = vmatpush.xpose.msra.mxu0 %v406
    %1010 = vmatpush.xpose.msra.mxu0 %v374
    %1011 = vmatpush.xpose.msra.mxu0 %v342
    %1012 = vmatpush.xpose.msra.mxu0 %v310
    %1013 = vmatpush.xpose.msra.mxu0 %v278
    %1014 = vmatpush.xpose.msra.mxu0 %v246
    %1015 = vmatpush.xpose.msra.mxu0 %v214
    %1016 = vmatpush.xpose.msra.mxu0 %v182
    %1017 = vmatpush.xpose.msra.mxu0 %v150
    %1018 = vmatpush.xpose.msra.mxu0 %v118
    %1019 = vmatpush.xpose.msra.mxu0 %v86
    %1020 = vmatmul.f32.gmra.mxu0 %v598
    %v1021 = vpop.f32.mrf.mxu0
    %v1022 = vadd.f32 %v999, %v1021
    %1023 = vmatmul.f32.gmra.mxu0 %v630
    %v1024 = vpop.f32.mrf.mxu0
    %v1025 = vadd.f32 %v1002, %v1024
    %1026 = vdwg.mxu0
    %1027 = vmatpush.xpose.msra.mxu0 %v567
    %1028 = vmatpush.xpose.msra.mxu0 %v535
    %1029 = vmatpush.xpose.msra.mxu0 %v503
    %1030 = vmatpush.xpose.msra.mxu0 %v471
    %1031 = vmatpush.xpose.msra.mxu0 %v439
    %1032 = vmatpush.xpose.msra.mxu0 %v407
    %1033 = vmatpush.xpose.msra.mxu0 %v375
    %1034 = vmatpush.xpose.msra.mxu0 %v343
    %1035 = vmatpush.xpose.msra.mxu0 %v311
    %1036 = vmatpush.xpose.msra.mxu0 %v279
    %1037 = vmatpush.xpose.msra.mxu0 %v247
    %1038 = vmatpush.xpose.msra.mxu0 %v215
    %1039 = vmatpush.xpose.msra.mxu0 %v183
    %1040 = vmatpush.xpose.msra.mxu0 %v151
    %1041 = vmatpush.xpose.msra.mxu0 %v119
    %1042 = vmatpush.xpose.msra.mxu0 %v87
    %1043 = vmatmul.f32.gmra.mxu0 %v599
    %v1044 = vpop.f32.mrf.mxu0
    %v1045 = vadd.f32 %v1022, %v1044
    %1046 = vmatmul.f32.gmra.mxu0 %v631
    %v1047 = vpop.f32.mrf.mxu0
    %v1048 = vadd.f32 %v1025, %v1047
    %1049 = vdwg.mxu0
    %1050 = vmatpush.xpose.msra.mxu0 %v568
    %1051 = vmatpush.xpose.msra.mxu0 %v536
    %1052 = vmatpush.xpose.msra.mxu0 %v504
    %1053 = vmatpush.xpose.msra.mxu0 %v472
    %1054 = vmatpush.xpose.msra.mxu0 %v440
    %1055 = vmatpush.xpose.msra.mxu0 %v408
    %1056 = vmatpush.xpose.msra.mxu0 %v376
    %1057 = vmatpush.xpose.msra.mxu0 %v344
    %1058 = vmatpush.xpose.msra.mxu0 %v312
    %1059 = vmatpush.xpose.msra.mxu0 %v280
    %1060 = vmatpush.xpose.msra.mxu0 %v248
    %1061 = vmatpush.xpose.msra.mxu0 %v216
    %1062 = vmatpush.xpose.msra.mxu0 %v184
    %1063 = vmatpush.xpose.msra.mxu0 %v152
    %1064 = vmatpush.xpose.msra.mxu0 %v120
    %1065 = vmatpush.xpose.msra.mxu0 %v88
    %1066 = vmatmul.f32.gmra.mxu0 %v600
    %v1067 = vpop.f32.mrf.mxu0
    %v1068 = vadd.f32 %v1045, %v1067
    %1069 = vmatmul.f32.gmra.mxu0 %v632
    %v1070 = vpop.f32.mrf.mxu0
    %v1071 = vadd.f32 %v1048, %v1070
    %1072 = vdwg.mxu0
    %1073 = vmatpush.xpose.msra.mxu0 %v569
    %1074 = vmatpush.xpose.msra.mxu0 %v537
    %1075 = vmatpush.xpose.msra.mxu0 %v505
    %1076 = vmatpush.xpose.msra.mxu0 %v473
    %1077 = vmatpush.xpose.msra.mxu0 %v441
    %1078 = vmatpush.xpose.msra.mxu0 %v409
    %1079 = vmatpush.xpose.msra.mxu0 %v377
    %1080 = vmatpush.xpose.msra.mxu0 %v345
    %1081 = vmatpush.xpose.msra.mxu0 %v313
    %1082 = vmatpush.xpose.msra.mxu0 %v281
    %1083 = vmatpush.xpose.msra.mxu0 %v249
    %1084 = vmatpush.xpose.msra.mxu0 %v217
    %1085 = vmatpush.xpose.msra.mxu0 %v185
    %1086 = vmatpush.xpose.msra.mxu0 %v153
    %1087 = vmatpush.xpose.msra.mxu0 %v121
    %1088 = vmatpush.xpose.msra.mxu0 %v89
    %1089 = vmatmul.f32.gmra.mxu0 %v601
    %v1090 = vpop.f32.mrf.mxu0
    %v1091 = vadd.f32 %v1068, %v1090
    %1092 = vmatmul.f32.gmra.mxu0 %v633
    %v1093 = vpop.f32.mrf.mxu0
    %v1094 = vadd.f32 %v1071, %v1093
    %1095 = vdwg.mxu0
    %1096 = vmatpush.xpose.msra.mxu0 %v570
    %1097 = vmatpush.xpose.msra.mxu0 %v538
    %1098 = vmatpush.xpose.msra.mxu0 %v506
    %1099 = vmatpush.xpose.msra.mxu0 %v474
    %1100 = vmatpush.xpose.msra.mxu0 %v442
    %1101 = vmatpush.xpose.msra.mxu0 %v410
    %1102 = vmatpush.xpose.msra.mxu0 %v378
    %1103 = vmatpush.xpose.msra.mxu0 %v346
    %1104 = vmatpush.xpose.msra.mxu0 %v314
    %1105 = vmatpush.xpose.msra.mxu0 %v282
    %1106 = vmatpush.xpose.msra.mxu0 %v250
    %1107 = vmatpush.xpose.msra.mxu0 %v218
    %1108 = vmatpush.xpose.msra.mxu0 %v186
    %1109 = vmatpush.xpose.msra.mxu0 %v154
    %1110 = vmatpush.xpose.msra.mxu0 %v122
    %1111 = vmatpush.xpose.msra.mxu0 %v90
    %1112 = vmatmul.f32.gmra.mxu0 %v602
    %v1113 = vpop.f32.mrf.mxu0
    %v1114 = vadd.f32 %v1091, %v1113
    %1115 = vmatmul.f32.gmra.mxu0 %v634
    %v1116 = vpop.f32.mrf.mxu0
    %v1117 = vadd.f32 %v1094, %v1116
    %1118 = vdwg.mxu0
    %1119 = vmatpush.xpose.msra.mxu0 %v571
    %1120 = vmatpush.xpose.msra.mxu0 %v539
    %1121 = vmatpush.xpose.msra.mxu0 %v507
    %1122 = vmatpush.xpose.msra.mxu0 %v475
    %1123 = vmatpush.xpose.msra.mxu0 %v443
    %1124 = vmatpush.xpose.msra.mxu0 %v411
    %1125 = vmatpush.xpose.msra.mxu0 %v379
    %1126 = vmatpush.xpose.msra.mxu0 %v347
    %1127 = vmatpush.xpose.msra.mxu0 %v315
    %1128 = vmatpush.xpose.msra.mxu0 %v283
    %1129 = vmatpush.xpose.msra.mxu0 %v251
    %1130 = vmatpush.xpose.msra.mxu0 %v219
    %1131 = vmatpush.xpose.msra.mxu0 %v187
    %1132 = vmatpush.xpose.msra.mxu0 %v155
    %1133 = vmatpush.xpose.msra.mxu0 %v123
    %1134 = vmatpush.xpose.msra.mxu0 %v91
    %1135 = vmatmul.f32.gmra.mxu0 %v603
    %v1136 = vpop.f32.mrf.mxu0
    %v1137 = vadd.f32 %v1114, %v1136
    %1138 = vmatmul.f32.gmra.mxu0 %v635
    %v1139 = vpop.f32.mrf.mxu0
    %v1140 = vadd.f32 %v1117, %v1139
    %1141 = vdwg.mxu0
    %1142 = vmatpush.xpose.msra.mxu0 %v572
    %1143 = vmatpush.xpose.msra.mxu0 %v540
    %1144 = vmatpush.xpose.msra.mxu0 %v508
    %1145 = vmatpush.xpose.msra.mxu0 %v476
    %1146 = vmatpush.xpose.msra.mxu0 %v444
    %1147 = vmatpush.xpose.msra.mxu0 %v412
    %1148 = vmatpush.xpose.msra.mxu0 %v380
    %1149 = vmatpush.xpose.msra.mxu0 %v348
    %1150 = vmatpush.xpose.msra.mxu0 %v316
    %1151 = vmatpush.xpose.msra.mxu0 %v284
    %1152 = vmatpush.xpose.msra.mxu0 %v252
    %1153 = vmatpush.xpose.msra.mxu0 %v220
    %1154 = vmatpush.xpose.msra.mxu0 %v188
    %1155 = vmatpush.xpose.msra.mxu0 %v156
    %1156 = vmatpush.xpose.msra.mxu0 %v124
    %1157 = vmatpush.xpose.msra.mxu0 %v92
    %1158 = vmatmul.f32.gmra.mxu0 %v604
    %v1159 = vpop.f32.mrf.mxu0
    %v1160 = vadd.f32 %v1137, %v1159
    %1161 = vmatmul.f32.gmra.mxu0 %v636
    %v1162 = vpop.f32.mrf.mxu0
    %v1163 = vadd.f32 %v1140, %v1162
    %1164 = vdwg.mxu0
    %1165 = vmatpush.xpose.msra.mxu0 %v573
    %1166 = vmatpush.xpose.msra.mxu0 %v541
    %1167 = vmatpush.xpose.msra.mxu0 %v509
    %1168 = vmatpush.xpose.msra.mxu0 %v477
    %1169 = vmatpush.xpose.msra.mxu0 %v445
    %1170 = vmatpush.xpose.msra.mxu0 %v413
    %1171 = vmatpush.xpose.msra.mxu0 %v381
    %1172 = vmatpush.xpose.msra.mxu0 %v349
    %1173 = vmatpush.xpose.msra.mxu0 %v317
    %1174 = vmatpush.xpose.msra.mxu0 %v285
    %1175 = vmatpush.xpose.msra.mxu0 %v253
    %1176 = vmatpush.xpose.msra.mxu0 %v221
    %1177 = vmatpush.xpose.msra.mxu0 %v189
    %1178 = vmatpush.xpose.msra.mxu0 %v157
    %1179 = vmatpush.xpose.msra.mxu0 %v125
    %1180 = vmatpush.xpose.msra.mxu0 %v93
    %1181 = vmatmul.f32.gmra.mxu0 %v605
    %v1182 = vpop.f32.mrf.mxu0
    %v1183 = vadd.f32 %v1160, %v1182
    %1184 = vmatmul.f32.gmra.mxu0 %v637
    %v1185 = vpop.f32.mrf.mxu0
    %v1186 = vadd.f32 %v1163, %v1185
    %1187 = vdwg.mxu0
    %1188 = vmatpush.xpose.msra.mxu0 %v574
    %1189 = vmatpush.xpose.msra.mxu0 %v542
    %1190 = vmatpush.xpose.msra.mxu0 %v510
    %1191 = vmatpush.xpose.msra.mxu0 %v478
    %1192 = vmatpush.xpose.msra.mxu0 %v446
    %1193 = vmatpush.xpose.msra.mxu0 %v414
    %1194 = vmatpush.xpose.msra.mxu0 %v382
    %1195 = vmatpush.xpose.msra.mxu0 %v350
    %1196 = vmatpush.xpose.msra.mxu0 %v318
    %1197 = vmatpush.xpose.msra.mxu0 %v286
    %1198 = vmatpush.xpose.msra.mxu0 %v254
    %1199 = vmatpush.xpose.msra.mxu0 %v222
    %1200 = vmatpush.xpose.msra.mxu0 %v190
    %1201 = vmatpush.xpose.msra.mxu0 %v158
    %1202 = vmatpush.xpose.msra.mxu0 %v126
    %1203 = vmatpush.xpose.msra.mxu0 %v94
    %1204 = vmatmul.f32.gmra.mxu0 %v606
    %v1205 = vpop.f32.mrf.mxu0
    %v1206 = vadd.f32 %v1183, %v1205
    %1207 = vmatmul.f32.gmra.mxu0 %v638
    %v1208 = vpop.f32.mrf.mxu0
    %v1209 = vadd.f32 %v1186, %v1208
    %1210 = vdwg.mxu0
    %1211 = vmatpush.xpose.msra.mxu0 %v575
    %1212 = vmatpush.xpose.msra.mxu0 %v543
    %1213 = vmatpush.xpose.msra.mxu0 %v511
    %1214 = vmatpush.xpose.msra.mxu0 %v479
    %1215 = vmatpush.xpose.msra.mxu0 %v447
    %1216 = vmatpush.xpose.msra.mxu0 %v415
    %1217 = vmatpush.xpose.msra.mxu0 %v383
    %1218 = vmatpush.xpose.msra.mxu0 %v351
    %1219 = vmatpush.xpose.msra.mxu0 %v319
    %1220 = vmatpush.xpose.msra.mxu0 %v287
    %1221 = vmatpush.xpose.msra.mxu0 %v255
    %1222 = vmatpush.xpose.msra.mxu0 %v223
    %1223 = vmatpush.xpose.msra.mxu0 %v191
    %1224 = vmatpush.xpose.msra.mxu0 %v159
    %1225 = vmatpush.xpose.msra.mxu0 %v127
    %1226 = vmatpush.xpose.msra.mxu0 %v95
    %1227 = vmatmul.f32.gmra.mxu0 %v607
    %v1228 = vpop.f32.mrf.mxu0
    %v1229 = vadd.f32 %v1206, %v1228
    %1230 = vmatmul.f32.gmra.mxu0 %v639
    %v1231 = vpop.f32.mrf.mxu0
    %v1232 = vadd.f32 %v1209, %v1231
    %1233 = vdwg.mxu0
    %1234 = vmatpush.xpose.msra.mxu0 %v576
    %1235 = vmatpush.xpose.msra.mxu0 %v544
    %1236 = vmatpush.xpose.msra.mxu0 %v512
    %1237 = vmatpush.xpose.msra.mxu0 %v480
    %1238 = vmatpush.xpose.msra.mxu0 %v448
    %1239 = vmatpush.xpose.msra.mxu0 %v416
    %1240 = vmatpush.xpose.msra.mxu0 %v384
    %1241 = vmatpush.xpose.msra.mxu0 %v352
    %1242 = vmatpush.xpose.msra.mxu0 %v320
    %1243 = vmatpush.xpose.msra.mxu0 %v288
    %1244 = vmatpush.xpose.msra.mxu0 %v256
    %1245 = vmatpush.xpose.msra.mxu0 %v224
    %1246 = vmatpush.xpose.msra.mxu0 %v192
    %1247 = vmatpush.xpose.msra.mxu0 %v160
    %1248 = vmatpush.xpose.msra.mxu0 %v128
    %1249 = vmatpush.xpose.msra.mxu0 %v96
    %1250 = vmatmul.f32.gmra.mxu0 %v608
    %v1251 = vpop.f32.mrf.mxu0
    %v1252 = vadd.f32 %v1229, %v1251
    %1253 = vmatmul.f32.gmra.mxu0 %v640
    %v1254 = vpop.f32.mrf.mxu0
    %v1255 = vadd.f32 %v1232, %v1254
    %1256 = vdwg.mxu0
    %1257 = vmatpush.xpose.msra.mxu0 %v577
    %1258 = vmatpush.xpose.msra.mxu0 %v545
    %1259 = vmatpush.xpose.msra.mxu0 %v513
    %1260 = vmatpush.xpose.msra.mxu0 %v481
    %1261 = vmatpush.xpose.msra.mxu0 %v449
    %1262 = vmatpush.xpose.msra.mxu0 %v417
    %1263 = vmatpush.xpose.msra.mxu0 %v385
    %1264 = vmatpush.xpose.msra.mxu0 %v353
    %1265 = vmatpush.xpose.msra.mxu0 %v321
    %1266 = vmatpush.xpose.msra.mxu0 %v289
    %1267 = vmatpush.xpose.msra.mxu0 %v257
    %1268 = vmatpush.xpose.msra.mxu0 %v225
    %1269 = vmatpush.xpose.msra.mxu0 %v193
    %1270 = vmatpush.xpose.msra.mxu0 %v161
    %1271 = vmatpush.xpose.msra.mxu0 %v129
    %1272 = vmatpush.xpose.msra.mxu0 %v97
    %1273 = vmatmul.f32.gmra.mxu0 %v609
    %v1274 = vpop.f32.mrf.mxu0
    %v1275 = vadd.f32 %v1252, %v1274
    %1276 = vmatmul.f32.gmra.mxu0 %v641
    %v1277 = vpop.f32.mrf.mxu0
    %v1278 = vadd.f32 %v1255, %v1277
    %1279 = vdwg.mxu0
    %1280 = vmatpush.xpose.msra.mxu0 %v578
    %1281 = vmatpush.xpose.msra.mxu0 %v546
    %1282 = vmatpush.xpose.msra.mxu0 %v514
    %1283 = vmatpush.xpose.msra.mxu0 %v482
    %1284 = vmatpush.xpose.msra.mxu0 %v450
    %1285 = vmatpush.xpose.msra.mxu0 %v418
    %1286 = vmatpush.xpose.msra.mxu0 %v386
    %1287 = vmatpush.xpose.msra.mxu0 %v354
    %1288 = vmatpush.xpose.msra.mxu0 %v322
    %1289 = vmatpush.xpose.msra.mxu0 %v290
    %1290 = vmatpush.xpose.msra.mxu0 %v258
    %1291 = vmatpush.xpose.msra.mxu0 %v226
    %1292 = vmatpush.xpose.msra.mxu0 %v194
    %1293 = vmatpush.xpose.msra.mxu0 %v162
    %1294 = vmatpush.xpose.msra.mxu0 %v130
    %1295 = vmatpush.xpose.msra.mxu0 %v98
    %1296 = vmatmul.f32.gmra.mxu0 %v610
    %v1297 = vpop.f32.mrf.mxu0
    %v1298 = vadd.f32 %v1275, %v1297
    %1299 = vmatmul.f32.gmra.mxu0 %v642
    %v1300 = vpop.f32.mrf.mxu0
    %v1301 = vadd.f32 %v1278, %v1300
    %1302 = vdwg.mxu0
    %1303 = vmatpush.xpose.msra.mxu0 %v579
    %1304 = vmatpush.xpose.msra.mxu0 %v547
    %1305 = vmatpush.xpose.msra.mxu0 %v515
    %1306 = vmatpush.xpose.msra.mxu0 %v483
    %1307 = vmatpush.xpose.msra.mxu0 %v451
    %1308 = vmatpush.xpose.msra.mxu0 %v419
    %1309 = vmatpush.xpose.msra.mxu0 %v387
    %1310 = vmatpush.xpose.msra.mxu0 %v355
    %1311 = vmatpush.xpose.msra.mxu0 %v323
    %1312 = vmatpush.xpose.msra.mxu0 %v291
    %1313 = vmatpush.xpose.msra.mxu0 %v259
    %1314 = vmatpush.xpose.msra.mxu0 %v227
    %1315 = vmatpush.xpose.msra.mxu0 %v195
    %1316 = vmatpush.xpose.msra.mxu0 %v163
    %1317 = vmatpush.xpose.msra.mxu0 %v131
    %1318 = vmatpush.xpose.msra.mxu0 %v99
    %1319 = vmatmul.f32.gmra.mxu0 %v611
    %v1320 = vpop.f32.mrf.mxu0
    %v1321 = vadd.f32 %v1298, %v1320
    %1322 = vmatmul.f32.gmra.mxu0 %v643
    %v1323 = vpop.f32.mrf.mxu0
    %v1324 = vadd.f32 %v1301, %v1323
    %1325 = vdwg.mxu0
    %1326 = vmatpush.xpose.msra.mxu0 %v580
    %1327 = vmatpush.xpose.msra.mxu0 %v548
    %1328 = vmatpush.xpose.msra.mxu0 %v516
    %1329 = vmatpush.xpose.msra.mxu0 %v484
    %1330 = vmatpush.xpose.msra.mxu0 %v452
    %1331 = vmatpush.xpose.msra.mxu0 %v420
    %1332 = vmatpush.xpose.msra.mxu0 %v388
    %1333 = vmatpush.xpose.msra.mxu0 %v356
    %1334 = vmatpush.xpose.msra.mxu0 %v324
    %1335 = vmatpush.xpose.msra.mxu0 %v292
    %1336 = vmatpush.xpose.msra.mxu0 %v260
    %1337 = vmatpush.xpose.msra.mxu0 %v228
    %1338 = vmatpush.xpose.msra.mxu0 %v196
    %1339 = vmatpush.xpose.msra.mxu0 %v164
    %1340 = vmatpush.xpose.msra.mxu0 %v132
    %1341 = vmatpush.xpose.msra.mxu0 %v100
    %1342 = vmatmul.f32.gmra.mxu0 %v612
    %v1343 = vpop.f32.mrf.mxu0
    %v1344 = vadd.f32 %v1321, %v1343
    %1345 = vmatmul.f32.gmra.mxu0 %v644
    %v1346 = vpop.f32.mrf.mxu0
    %v1347 = vadd.f32 %v1324, %v1346
    %1348 = vdwg.mxu0
    %1349 = vmatpush.xpose.msra.mxu0 %v581
    %1350 = vmatpush.xpose.msra.mxu0 %v549
    %1351 = vmatpush.xpose.msra.mxu0 %v517
    %1352 = vmatpush.xpose.msra.mxu0 %v485
    %1353 = vmatpush.xpose.msra.mxu0 %v453
    %1354 = vmatpush.xpose.msra.mxu0 %v421
    %1355 = vmatpush.xpose.msra.mxu0 %v389
    %1356 = vmatpush.xpose.msra.mxu0 %v357
    %1357 = vmatpush.xpose.msra.mxu0 %v325
    %1358 = vmatpush.xpose.msra.mxu0 %v293
    %1359 = vmatpush.xpose.msra.mxu0 %v261
    %1360 = vmatpush.xpose.msra.mxu0 %v229
    %1361 = vmatpush.xpose.msra.mxu0 %v197
    %1362 = vmatpush.xpose.msra.mxu0 %v165
    %1363 = vmatpush.xpose.msra.mxu0 %v133
    %1364 = vmatpush.xpose.msra.mxu0 %v101
    %1365 = vmatmul.f32.gmra.mxu0 %v613
    %v1366 = vpop.f32.mrf.mxu0
    %v1367 = vadd.f32 %v1344, %v1366
    %1368 = vmatmul.f32.gmra.mxu0 %v645
    %v1369 = vpop.f32.mrf.mxu0
    %v1370 = vadd.f32 %v1347, %v1369
    %1371 = vdwg.mxu0
    %1372 = vmatpush.xpose.msra.mxu0 %v582
    %1373 = vmatpush.xpose.msra.mxu0 %v550
    %1374 = vmatpush.xpose.msra.mxu0 %v518
    %1375 = vmatpush.xpose.msra.mxu0 %v486
    %1376 = vmatpush.xpose.msra.mxu0 %v454
    %1377 = vmatpush.xpose.msra.mxu0 %v422
    %1378 = vmatpush.xpose.msra.mxu0 %v390
    %1379 = vmatpush.xpose.msra.mxu0 %v358
    %1380 = vmatpush.xpose.msra.mxu0 %v326
    %1381 = vmatpush.xpose.msra.mxu0 %v294
    %1382 = vmatpush.xpose.msra.mxu0 %v262
    %1383 = vmatpush.xpose.msra.mxu0 %v230
    %1384 = vmatpush.xpose.msra.mxu0 %v198
    %1385 = vmatpush.xpose.msra.mxu0 %v166
    %1386 = vmatpush.xpose.msra.mxu0 %v134
    %1387 = vmatpush.xpose.msra.mxu0 %v102
    %1388 = vmatmul.f32.gmra.mxu0 %v614
    %v1389 = vpop.f32.mrf.mxu0
    %v1390 = vadd.f32 %v1367, %v1389
    %1391 = vmatmul.f32.gmra.mxu0 %v646
    %v1392 = vpop.f32.mrf.mxu0
    %v1393 = vadd.f32 %v1370, %v1392
    %1394 = vdwg.mxu0
    %v1395 = vperm.slane %v68, 2
    %1397 = vset.pattern.permute.xlu0 2
    %1398 = vperm.xlu0 %1397, %v69
    %v1399 = vpop.permute.xlu0 %1398
    %v1401 = vmin.f32 %v1395, %v1399
    %v1402 = vperm.slane %v68, 0
    %1403 = vset.pattern.permute.xlu0 0
    %1404 = vperm.xlu0 %1403, %v69
    %v1405 = vpop.permute.xlu0 %1404
    %v1407 = vmax.f32 %v1402, %v1405
    %v1408 = vsub.f32 %v1401, %v1407
    %v1409 = vmax.f32 %v1408, 0.0
    %v1410 = vperm.slane %v68, 3
    %1411 = vset.pattern.permute.xlu0 3
    %1412 = vperm.xlu0 %1411, %v69
    %v1413 = vpop.permute.xlu0 %1412
    %v1415 = vmin.f32 %v1410, %v1413
    %v1416 = vperm.slane %v68, 1
    %1417 = vset.pattern.permute.xlu0 1
    %1418 = vperm.xlu0 %1417, %v69
    %v1419 = vpop.permute.xlu0 %1418
    %v1421 = vmax.f32 %v1416, %v1419
    %v1422 = vsub.f32 %v1415, %v1421
    %v1423 = vmax.f32 %v1422, 0.0
    %v1424 = vmul.f32 %v1409, %v1423
    %v1426 = vrot.slane %v68, 6
    %v1428 = vsub.f32 %v68, %v1426
    %v1430 = vrot.slane %v1428, 1
    %v1432 = vmul.f32 %v1428, %v1430
    %1433 = vrot.lane.b32.xlu0 %v69, 2
    %v1434 = vpop.permute.xlu0 %1433
    %v1436 = vsub.f32 %v69, %v1434
    %1438 = vrot.lane.b32.xlu0 %v1436, 127
    %v1439 = vpop.permute.xlu0 %1438
    %v1441 = vmul.f32 %v1436, %v1439
    %v1442 = vperm.slane %v1432, 2
    %1444 = vset.pattern.permute.xlu0 2
    %1445 = vperm.xlu0 %1444, %v1441
    %v1446 = vpop.permute.xlu0 %1445
    %v1448 = vadd.f32 %v1442, %v1446
    %v1449 = vsub.f32 %v1448, %v1424
    %v1450 = vrcp.pop %v1449
    %v1451 = vmul.f32 %v1449, %v1450
    %v1452 = vsub.f32 1.0, %v1451
    %v1453 = vmul.f32 %v1450, %v1452
    %v1454 = vadd.f32 %v1450, %v1453
    %vm1455 = vweird.f32 %v1449
    %vm1456 = vweird.f32 %v1450
    %vm1457 = vmor %vm1455, %vm1456
    %v1458 = vsel %vm1457, %v1450, %v1454
    %v1459 = vand.u32 2147483647, %v1449
    %vm1460 = vcmp.eq.f32.partialorder %v1459, 8.507059e+37
    %v1461 = vand.u32 %v1449, 2147483648
    %v1462 = vor.u32 1.1754944e-38, %v1461
    %v1463 = vsel %vm1460, %v1462, %v1458
    %v1464 = vmul.f32 %v1424, %v1463
    %v1465 = vrot.slane %v1464, 4
    %v1466 = vmax.f32 %v1464, %v1465
    %v1467 = vrot.slane %v1466, 2
    %v1468 = vmax.f32 %v1466, %v1467
    %v1469 = vrot.slane %v1468, 1
    %v1470 = vmax.f32 %v1468, %v1469
    %v1471 = vlaneseq
    %v1472 = vshrl.u32 %v1471, 7
    %vm1473 = vcmp.eq.f32.partialorder %v1464, %v1470
    %v1474 = vsel %vm1473, %v1472, 8
    %v1475 = vrot.slane %v1474, 4
    %vm1476 = vcmp.lt.s32.totalorder %v1474, %v1475
    %v1477 = vsel %vm1476, %v1474, %v1475
    %v1478 = vrot.slane %v1477, 2
    %vm1479 = vcmp.lt.s32.totalorder %v1477, %v1478
    %v1480 = vsel %vm1479, %v1477, %v1478
    %v1481 = vrot.slane %v1480, 1
    %vm1482 = vcmp.lt.s32.totalorder %v1480, %v1481
    %v1483 = vsel %vm1482, %v1480, %v1481
    %vm1484 = vcmp.eq.s32.totalorder %v1472, %v1483
    %vm1485 = vcmp.gt.f32.partialorder %v1470, 0.5
    %v1486 = vsel %vm1485, 1, 0
    %v1487 = vcvt.s32.f32 %v1486
    %1488 = vset.pattern.permute.xlu0 0
    %1489 = vperm.xlu0 %1488, %v70
    %v1490 = vpop.permute.xlu0 %1489
    %v1491 = vsel %vm1484, %v1490, 0
    %v1492 = vrot.slane %v1491, 4
    %v1493 = vadd.s32 %v1491, %v1492
    %v1494 = vrot.slane %v1493, 2
    %v1495 = vadd.s32 %v1493, %v1494
    %v1496 = vrot.slane %v1495, 1
    %v1497 = vadd.s32 %v1495, %v1496
    %v1498 = vmax.f32 %v1390, %v1393
    %v1499 = vrot.slane %v1498, 4
    %v1500 = vmax.f32 %v1498, %v1499
    %v1501 = vrot.slane %v1500, 2
    %v1502 = vmax.f32 %v1500, %v1501
    %v1503 = vrot.slane %v1502, 1
    %v1504 = vmax.f32 %v1502, %v1503
    %v1505 = vsub.f32 %v1390, %v1504
    %v1506 = vsub.f32 %v1393, %v1504
    %v1507 = vmul.f32 %v1505, 1.442695
    %v1508 = vpow.pop %v1507
    %v1509 = vmul.f32 %v1506, 1.442695
    %v1510 = vpow.pop %v1509
    %v1511 = vadd.f32 %v1508, %v1510
    %v1512 = vrot.slane %v1511, 4
    %v1513 = vadd.f32 %v1511, %v1512
    %v1514 = vrot.slane %v1513, 2
    %v1515 = vadd.f32 %v1513, %v1514
    %v1516 = vrot.slane %v1515, 1
    %v1517 = vadd.f32 %v1515, %v1516
    %v1518 = vlog2.pop %v1517
    %v1519 = vmul.f32 %v1518, 0.6931472
    %v1520 = vadd.f32 %v1504, %v1519
    %v1521 = vadd.s32 %v1472, 8
    %vm1522 = vcmp.eq.s32.totalorder %v1472, %v1497
    %vm1523 = vcmp.eq.s32.totalorder %v1521, %v1497
    %v1524 = vsel %vm1522, %v1390, 0.0
    %v1525 = vsel %vm1523, %v1393, 0.0
    %v1526 = vadd.f32 %v1524, %v1525
    %v1527 = vrot.slane %v1526, 4
    %v1528 = vadd.f32 %v1526, %v1527
    %v1529 = vrot.slane %v1528, 2
    %v1530 = vadd.f32 %v1528, %v1529
    %v1531 = vrot.slane %v1530, 1
    %v1532 = vadd.f32 %v1530, %v1531
    %v1533 = vsub.f32 %v1520, %v1532
    %v1534 = vcvt.s32.f32 %v1483
    %v1535 = vcvt.s32.f32 %v1497
    %vm1536 = vcmask 1040384
    %v1537 = vsel %vm1536, %v1533, %v1487
    %vm1538 = vcmask 1041408
    %v1539 = vsel %vm1538, %v1537, %v1470
    %vm1540 = vcmask 1042432
    %v1541 = vsel %vm1540, %v1539, %v1534
    %vm1542 = vcmask 1043456
    %v1543 = vsel %vm1542, %v1541, %v1535
    %vm1544 = vcmask 1044480
    %v1545 = vsel %vm1544, %v1543, 0.0
    %vm1546 = vcmask 1045504
    %v1547 = vsel %vm1546, %v1545, 0.0
    %vm1548 = vcmask 1046528
    %v1549 = vsel %vm1548, %v1547, 0.0
    %1550 = vst [vmem:[%s6] sm:$0xff] %v1549
    // Predicated region
    $region38: #{classification_adversarial_loss1_fwd.1} parent=1 // pred_check
      _
    $region39: #{classification_adversarial_loss1_fwd.1} parent=1 // pred_check_branch
      %1552 = sbr.rel (0) target = $region41
    $region40: #{classification_adversarial_loss1_fwd.1} parent=1 // pred_region
      _
    $region41: #{classification_adversarial_loss1_fwd.1} parent=1 // pred_fallthru
      _
    // Predicated region
    $region42: #{classification_adversarial_loss1_fwd.1} parent=1 // pred_check
      _
    $region43: #{classification_adversarial_loss1_fwd.1} parent=1 // pred_check_branch
      %1554 = sbr.rel (0) target = $region45
    $region44: #{classification_adversarial_loss1_fwd.1} parent=1 // pred_region
      _
    $region45: #{classification_adversarial_loss1_fwd.1} parent=1 // pred_fallthru
      _
    %1555 = vsyncpa [#allocation3], 1
    %1556 = vsyncpa [#allocation5], 1

</llo_original>
